<compile_context>
chip_gen: v7x
topology: tpu7x:2x2x1
jax: 0.10.0
libtpu: 0.0.40
codegen_flags: <defaults>
</compile_context>

<pallas_src>
import numpy as np
import jax
import jax.numpy as jnp
from jax import lax
from jax.experimental import pallas as pl
from jax.experimental.pallas import tpu as pltpu

MITR = 300        # ImplicitModel default mitr
TOL = 3e-6        # ImplicitModel default tol
V_NORM = 0.95     # ImplicitFunctionInf inf-norm ball radius
CHUNK = 8         # Picard iterations per convergence check (unrolled)
BULK_TOL = 1e-2   # exit criterion for the bf16 bulk phase
BULK_MAX = 160    # iteration budget for the bf16 bulk phase


def _round_up(x, m):
    return ((x + m - 1) // m) * m


# ----------------------------- Pallas kernel ------------------------------- #
def _implicit_rnn_kernel(xp_ref, At_ref, Wh_ref, Ct_ref, out_ref, h_ref, x_scr):
    """One (batch_block, time_block) grid step.

    xp_ref : (tb, bb, n_pad + H)  precomputed x @ [Bx^T | Dx^T] for this block
    At_ref : (n_pad, n_pad)       A^T, zero-padded to 128 lanes
    Wh_ref : (H, n_pad + H)       [Bh^T | Dh^T]  (h-dependent projection)
    Ct_ref : (n_pad, H)           C^T, zero-padded rows
    out_ref: (tb, bb, H)          per-timestep hidden outputs
    h_ref  : (bb, H)              carried hidden state (revisited over t)
    x_scr  : (bb, n_pad)          warm-start fixed point carried over t
    """
    @pl.when(pl.program_id(1) == 0)
    def _():
        h_ref[...] = jnp.zeros_like(h_ref)
        x_scr[...] = jnp.zeros_like(x_scr)

    At = At_ref[...]                       # (n_pad, n_pad) f32
    At_bf = At.astype(jnp.bfloat16)        # hoisted once per grid step
    Wh = Wh_ref[...]                       # (H, n_pad + H)
    Ct = Ct_ref[...]                       # (n_pad, H)
    n_pad = At.shape[0]
    tb = xp_ref.shape[0]

    def picard_phase(X, BU, it0, it_max, tol, use_bf16):
        # Convergence checked once per CHUNK iterations: keeps the XLU
        # max-reduce + scalar branch off the per-matmul serial chain.
        def cond(c):
            it, err, _ = c
            return jnp.logical_and(it < it_max, err >= tol)

        def step(Xc):
            if use_bf16:
                acc = jnp.dot(Xc.astype(jnp.bfloat16), At_bf,
                              preferred_element_type=jnp.float32)
            else:
                acc = jnp.dot(Xc, At, preferred_element_type=jnp.float32)
            return jnp.maximum(acc + BU, 0.0)

        def body(c):
            it, _, Xc = c
            for _ in range(CHUNK - 1):     # unrolled, no convergence check
                Xc = step(Xc)
            Xn = step(Xc)
            err = jnp.max(jnp.abs(Xn - Xc))
            return it + CHUNK, err, Xn

        it, _, X = lax.while_loop(cond, body, (it0, jnp.float32(jnp.inf), X))
        return it, X

    def timestep(i, carry):
        h, X = carry
        # x-projection was hoisted to the wrapper; only h @ Wh remains here.
        P = xp_ref[i] + jnp.dot(h, Wh, preferred_element_type=jnp.float32)
        BU = P[:, :n_pad]                  # (bb, n_pad), lane-dense
        DU = P[:, n_pad:]                  # (bb, H)

        # Warm-started Picard iteration for X = ReLU(X @ A^T + BU):
        #   phase 1: bf16 bulk iterations down to BULK_TOL (cheap MXU passes)
        #   phase 2: f32 polish down to the reference tol (3e-6)
        it, X = picard_phase(X, BU, jnp.int32(0), BULK_MAX, BULK_TOL, True)
        _, X = picard_phase(X, BU, it, MITR, TOL, False)

        # h_t = (C X + D U)^T = X_row @ C^T + DU
        h_new = jnp.dot(X, Ct, preferred_element_type=jnp.float32) + DU
        out_ref[i] = h_new
        return (h_new, X)

    h, X = lax.fori_loop(0, tb, timestep, (h_ref[...], x_scr[...]))
    h_ref[...] = h
    x_scr[...] = X        # warm start for the next time block


# ------------------------------- Wrapper ------------------------------------ #
def implicit_rnn_forward(x, A, Bm, C, D, *, time_block=8, batch_block=128):
    """x: (B, T, input_size) batch-first (PyTorch convention). Returns (outputs, h)."""
    Bsz, T, Din = x.shape
    n = A.shape[0]
    H = C.shape[0]
    p = Bm.shape[1]
    assert p == Din + H

    # --- block sizing --------------------------------------------------------
    # Batch: pad to a multiple of 8 sublanes, blocks of up to 128 MXU rows, and
    # keep >=2 batch blocks when possible so v7x's 2 TensorCores both get work.
    b8 = _round_up(Bsz, 8)
    cap = min(_round_up(max(batch_block, 8), 8), 128)
    nb = max(2, -(-b8 // cap)) if b8 >= 16 else 1
    bb = _round_up(-(-b8 // nb), 8)
    Bp = nb * bb
    # Time: largest divisor of T that is <= time_block (avoids the tb=1 trap).
    tb = max(d for d in range(1, min(max(time_block, 1), T) + 1) if T % d == 0)
    NB, NT = Bp // bb, T // tb

    n_pad = _round_up(n, 128)              # lane-dense Picard operands
    f32 = jnp.float32
    A32, Bm32, C32, D32 = (jnp.asarray(m, f32) for m in (A, Bm, C, D))

    # Zero-padded weights; padded X columns stay exactly zero through ReLU.
    At = jnp.zeros((n_pad, n_pad), f32).at[:n, :n].set(A32.T)        # (n_pad, n_pad)
    Bt = jnp.zeros((p, n_pad), f32).at[:, :n].set(Bm32.T)            # (p, n_pad)
    Wx = jnp.concatenate([Bt[:Din], D32[:, :Din].T], axis=1)         # (Din, n_pad+H)
    Wh = jnp.concatenate([Bt[Din:], D32[:, Din:].T], axis=1)         # (H,   n_pad+H)
    Ct = jnp.zeros((n_pad, H), f32).at[:n, :].set(C32.T)             # (n_pad, H)

    x_tm = jnp.transpose(x, (1, 0, 2)).astype(f32)                   # (T, B, Din)
    if Bp != Bsz:
        # Zero-padded batch rows stay exactly zero through the recurrence.
        x_tm = jnp.pad(x_tm, ((0, 0), (0, Bp - Bsz), (0, 0)))

    # Hoist the h-independent projection out of the recurrence (one big matmul).
    XP = jnp.einsum('tbd,dk->tbk', x_tm, Wx)                         # (T, Bp, n_pad+H)
    wcols = n_pad + H

    def const_spec(arr):
        nd = arr.ndim
        return pl.BlockSpec(arr.shape, lambda b, t, _nd=nd: (0,) * _nd)

    outputs_tm, h_final = pl.pallas_call(
        _implicit_rnn_kernel,
        out_shape=(jax.ShapeDtypeStruct((T, Bp, H), f32),
                   jax.ShapeDtypeStruct((Bp, H), f32)),
        grid_spec=pltpu.PrefetchScalarGridSpec(
            num_scalar_prefetch=0,
            grid=(NB, NT),
            in_specs=[
                pl.BlockSpec((tb, bb, wcols), lambda b, t: (t, b, 0)),   # XP block
                const_spec(At),
                const_spec(Wh),
                const_spec(Ct),
            ],
            out_specs=[
                pl.BlockSpec((tb, bb, H), lambda b, t: (t, b, 0)),       # outputs block
                pl.BlockSpec((bb, H), lambda b, t: (b, 0)),              # h (carried over t)
            ],
            scratch_shapes=[pltpu.VMEM((bb, n_pad), f32)],               # warm-start X
        ),
        compiler_params=pltpu.CompilerParams(
            dimension_semantics=("parallel", "arbitrary")),  # batch parallel, time sequential
    )(XP, At, Wh, Ct)

    outputs = jnp.transpose(outputs_tm[:, :Bsz, :], (1, 0, 2))       # back to (B, T, H)
    return outputs, h_final[:Bsz]


# --------------------------- Pure-numpy reference --------------------------- #
def reference_forward(x, A, Bm, C, D):
    x = np.asarray(x, dtype=np.float32)
    A, Bm, C, D = (np.asarray(m, dtype=np.float32) for m in (A, Bm, C, D))
    Bsz, T, Din = x.shape
    n, H = A.shape[0], C.shape[0]
    h = np.zeros((Bsz, H), dtype=np.float32)
    outs = np.zeros((Bsz, T, H), dtype=np.float32)
    for t in range(T):
        U = np.concatenate([x[:, t, :], h], axis=-1).T        # (p, B)
        X = np.zeros((n, Bsz), dtype=np.float32)
        for _ in range(MITR):
            X_new = np.maximum(A @ X + Bm @ U, 0.0)
            err = np.max(np.abs(X_new - X))
            X = X_new
            if err < TOL:
                break
        h = (C @ X + D @ U).T
        outs[:, t, :] = h
    return outs, h


# ----------------------------------- Main ----------------------------------- #
if __name__ == "__main__":
    batch, seq, input_size, hidden_size, n = 12, 16, 16, 32, 64
    p = input_size + hidden_size

    key = jax.random.PRNGKey(0)
    kx, kA, kB, kC, kD = jax.random.split(key, 5)

    x = jax.random.normal(kx, (batch, seq, input_size), dtype=jnp.float32)

    # torch init: randn(shape) / n
    A = jax.random.normal(kA, (n, n), dtype=jnp.float32) / n
    Bm = jax.random.normal(kB, (n, p), dtype=jnp.float32) / n
    C = jax.random.normal(kC, (hidden_size, n), dtype=jnp.float32) / n
    D = jax.random.normal(kD, (hidden_size, p), dtype=jnp.float32) / n

    # Make ||A||_inf <= 0.855 so ImplicitFunctionInf's projection is identity and
    # the Picard map is a contraction (see TODO on the exact L1-ball projection).
    row_l1 = jnp.sum(jnp.abs(A), axis=1, keepdims=True)
    A = A * jnp.minimum(1.0, (V_NORM * 0.9) / jnp.maximum(row_l1, 1e-12))

    outputs, h = implicit_rnn_forward(x, A, Bm, C, D, time_block=8, batch_block=128)
    outputs = jax.block_until_ready(outputs)
    h = jax.block_until_ready(h)

    ref_out, ref_h = reference_forward(x, A, Bm, C, D)
    assert outputs.shape == (batch, seq, hidden_size)
    assert h.shape == (batch, hidden_size)
    # Tolerance note: the f32 polish phase enforces the same 3e-6 single-step
    # criterion as the reference (the bf16 bulk phase never decides convergence),
    # so the residual gap vs the reference is bounded by tol/(1-||A||_inf) ~ 2e-5
    # on X, well inside the tolerances below.
    np.testing.assert_allclose(np.asarray(outputs), ref_out, rtol=2e-4, atol=1e-4)
    np.testing.assert_allclose(np.asarray(h), ref_h, rtol=2e-4, atol=1e-4)

    print("KERNEL_OK")
</pallas_src>

<mosaic_0001>
module attributes {stable_mosaic.version = 11 : i64} {
  func.func @_implicit_rnn_kernel(%arg0: i32, %arg1: i32, %arg2: memref<8x8x160xf32, #tpu.memory_space<vmem>>, %arg3: memref<128x128xf32, #tpu.memory_space<vmem>>, %arg4: memref<32x160xf32, #tpu.memory_space<vmem>>, %arg5: memref<128x32xf32, #tpu.memory_space<vmem>>, %arg6: memref<8x8x32xf32, #tpu.memory_space<vmem>>, %arg7: memref<8x32xf32, #tpu.memory_space<vmem>>, %arg8: memref<8x128xf32, #tpu.memory_space<vmem>>) attributes {dimension_semantics = [#tpu.dimension_semantics<parallel>, #tpu.dimension_semantics<arbitrary>], iteration_bounds = array<i64: 2, 2>, scalar_prefetch = 0 : i64, scratch_operands = 1 : i64, tpu.core_type = #tpu.core_type<tc>, window_params = [{transform_indices = @transform_0, window_bounds = array<i64: 8, 8, 160>}, {pipeline_mode = #tpu.pipeline_mode<synchronous>, transform_indices = @transform_1, window_bounds = array<i64: 128, 128>}, {pipeline_mode = #tpu.pipeline_mode<synchronous>, transform_indices = @transform_2, window_bounds = array<i64: 32, 160>}, {pipeline_mode = #tpu.pipeline_mode<synchronous>, transform_indices = @transform_3, window_bounds = array<i64: 128, 32>}, {transform_indices = @transform_4, window_bounds = array<i64: 8, 8, 32>}, {transform_indices = @transform_5, window_bounds = array<i64: 8, 32>}]} {
    %c0_i32 = arith.constant 0 : i32
    %0 = arith.cmpi eq, %arg1, %c0_i32 : i32
    %1 = arith.extui %0 : i1 to i32
    %c0_i32_0 = arith.constant 0 : i32
    %2 = arith.cmpi ne, %1, %c0_i32_0 : i32
    scf.if %2 {
      %cst = arith.constant 0.000000e+00 : f32
      %13 = vector.broadcast %cst : f32 to vector<8x32xf32>
      %c0_16 = arith.constant 0 : index
      %c0_17 = arith.constant 0 : index
      %14 = vector.load %arg7[%c0_16, %c0_17] : memref<8x32xf32, #tpu.memory_space<vmem>>, vector<8x32xf32>
      tpu.vector_store %arg7[%c0_16, %c0_17], %13 {strides = array<i32>} : memref<8x32xf32, #tpu.memory_space<vmem>>, vector<8x32xf32>,
      %cst_18 = arith.constant 0.000000e+00 : f32
      %15 = vector.broadcast %cst_18 : f32 to vector<8x128xf32>
      %c0_19 = arith.constant 0 : index
      %c0_20 = arith.constant 0 : index
      %16 = vector.load %arg8[%c0_19, %c0_20] : memref<8x128xf32, #tpu.memory_space<vmem>>, vector<8x128xf32>
      tpu.vector_store %arg8[%c0_19, %c0_20], %15 {strides = array<i32>} : memref<8x128xf32, #tpu.memory_space<vmem>>, vector<8x128xf32>,
    } else {
    }
    %c0 = arith.constant 0 : index
    %c0_1 = arith.constant 0 : index
    %3 = vector.load %arg3[%c0, %c0_1] : memref<128x128xf32, #tpu.memory_space<vmem>>, vector<128x128xf32>
    %4 = arith.truncf %3 : vector<128x128xf32> to vector<128x128xbf16>
    %c0_2 = arith.constant 0 : index
    %c0_3 = arith.constant 0 : index
    %5 = vector.load %arg4[%c0_2, %c0_3] : memref<32x160xf32, #tpu.memory_space<vmem>>, vector<32x160xf32>
    %c0_4 = arith.constant 0 : index
    %c0_5 = arith.constant 0 : index
    %6 = vector.load %arg5[%c0_4, %c0_5] : memref<128x32xf32, #tpu.memory_space<vmem>>, vector<128x32xf32>
    %c0_6 = arith.constant 0 : index
    %c0_7 = arith.constant 0 : index
    %7 = vector.load %arg7[%c0_6, %c0_7] : memref<8x32xf32, #tpu.memory_space<vmem>>, vector<8x32xf32>
    %c0_8 = arith.constant 0 : index
    %c0_9 = arith.constant 0 : index
    %8 = vector.load %arg8[%c0_8, %c0_9] : memref<8x128xf32, #tpu.memory_space<vmem>>, vector<8x128xf32>
    %c0_i32_10 = arith.constant 0 : i32
    %c8_i32 = arith.constant 8 : i32
    %9 = arith.addi %c0_i32_10, %c8_i32 : i32
    %c1_i32 = arith.constant 1 : i32
    %10:2 = scf.for %arg9 = %c0_i32_10 to %9 step %c1_i32 iter_args(%arg10 = %7, %arg11 = %8) -> (vector<8x32xf32>, vector<8x128xf32>)  : i32 {
      %13 = arith.index_cast %arg9 : i32 to index
      %c0_16 = arith.constant 0 : index
      %c0_17 = arith.constant 0 : index
      %14 = vector.load %arg2[%13, %c0_16, %c0_17] : memref<8x8x160xf32, #tpu.memory_space<vmem>>, vector<1x8x160xf32>
      %15 = vector.shape_cast %14 : vector<1x8x160xf32> to vector<8x160xf32>
      %cst = arith.constant dense<0.000000e+00> : vector<8x160xf32>
      %16 = tpu.matmul %arg10, %5, %cst {dimension_numbers = #tpu.dot_dimension_numbers<[1], [0], [0], [1], [0, 0, 1, 1], [], []>} : vector<8x32xf32>, vector<32x160xf32>, vector<8x160xf32> -> vector<8x160xf32>
      %17 = arith.addf %15, %16 : vector<8x160xf32>
      %18 = vector.extract_strided_slice %17 {offsets = [0, 0], sizes = [8, 128], strides = [1, 1]} : vector<8x160xf32> to vector<8x128xf32>
      %19 = vector.extract_strided_slice %17 {offsets = [0, 128], sizes = [8, 32], strides = [1, 1]} : vector<8x160xf32> to vector<8x32xf32>
      %c0_i32_18 = arith.constant 0 : i32
      %cst_19 = arith.constant 0x7F800000 : f32
      %20:3 = scf.while (%arg12 = %c0_i32_18, %arg13 = %cst_19, %arg14 = %arg11) : (i32, f32, vector<8x128xf32>) -> (i32, f32, vector<8x128xf32>) {
        %c160_i32 = arith.constant 160 : i32
        %28 = arith.cmpi slt, %arg12, %c160_i32 : i32
        %cst_24 = arith.constant 0.00999999977 : f32
        %29 = arith.cmpf oge, %arg13, %cst_24 : f32
        %30 = arith.andi %28, %29 : i1
        scf.condition(%30) %arg12, %arg13, %arg14 : i32, f32, vector<8x128xf32>
      } do {
      ^bb0(%arg12: i32, %arg13: f32, %arg14: vector<8x128xf32>):
        %28 = arith.truncf %arg14 : vector<8x128xf32> to vector<8x128xbf16>
        %cst_24 = arith.constant dense<0.000000e+00> : vector<8x128xf32>
        %29 = tpu.matmul %28, %4, %cst_24 {dimension_numbers = #tpu.dot_dimension_numbers<[1], [0], [0], [1], [0, 0, 1, 1], [], []>} : vector<8x128xbf16>, vector<128x128xbf16>, vector<8x128xf32> -> vector<8x128xf32>
        %30 = arith.addf %29, %18 : vector<8x128xf32>
        %cst_25 = arith.constant 0.000000e+00 : f32
        %31 = vector.broadcast %cst_25 : f32 to vector<8x128xf32>
        %32 = arith.maximumf %30, %31 : vector<8x128xf32>
        %33 = arith.truncf %32 : vector<8x128xf32> to vector<8x128xbf16>
        %cst_26 = arith.constant dense<0.000000e+00> : vector<8x128xf32>
        %34 = tpu.matmul %33, %4, %cst_26 {dimension_numbers = #tpu.dot_dimension_numbers<[1], [0], [0], [1], [0, 0, 1, 1], [], []>} : vector<8x128xbf16>, vector<128x128xbf16>, vector<8x128xf32> -> vector<8x128xf32>
        %35 = arith.addf %34, %18 : vector<8x128xf32>
        %cst_27 = arith.constant 0.000000e+00 : f32
        %36 = vector.broadcast %cst_27 : f32 to vector<8x128xf32>
        %37 = arith.maximumf %35, %36 : vector<8x128xf32>
        %38 = arith.truncf %37 : vector<8x128xf32> to vector<8x128xbf16>
        %cst_28 = arith.constant dense<0.000000e+00> : vector<8x128xf32>
        %39 = tpu.matmul %38, %4, %cst_28 {dimension_numbers = #tpu.dot_dimension_numbers<[1], [0], [0], [1], [0, 0, 1, 1], [], []>} : vector<8x128xbf16>, vector<128x128xbf16>, vector<8x128xf32> -> vector<8x128xf32>
        %40 = arith.addf %39, %18 : vector<8x128xf32>
        %cst_29 = arith.constant 0.000000e+00 : f32
        %41 = vector.broadcast %cst_29 : f32 to vector<8x128xf32>
        %42 = arith.maximumf %40, %41 : vector<8x128xf32>
        %43 = arith.truncf %42 : vector<8x128xf32> to vector<8x128xbf16>
        %cst_30 = arith.constant dense<0.000000e+00> : vector<8x128xf32>
        %44 = tpu.matmul %43, %4, %cst_30 {dimension_numbers = #tpu.dot_dimension_numbers<[1], [0], [0], [1], [0, 0, 1, 1], [], []>} : vector<8x128xbf16>, vector<128x128xbf16>, vector<8x128xf32> -> vector<8x128xf32>
        %45 = arith.addf %44, %18 : vector<8x128xf32>
        %cst_31 = arith.constant 0.000000e+00 : f32
        %46 = vector.broadcast %cst_31 : f32 to vector<8x128xf32>
        %47 = arith.maximumf %45, %46 : vector<8x128xf32>
        %48 = arith.truncf %47 : vector<8x128xf32> to vector<8x128xbf16>
        %cst_32 = arith.constant dense<0.000000e+00> : vector<8x128xf32>
        %49 = tpu.matmul %48, %4, %cst_32 {dimension_numbers = #tpu.dot_dimension_numbers<[1], [0], [0], [1], [0, 0, 1, 1], [], []>} : vector<8x128xbf16>, vector<128x128xbf16>, vector<8x128xf32> -> vector<8x128xf32>
        %50 = arith.addf %49, %18 : vector<8x128xf32>
        %cst_33 = arith.constant 0.000000e+00 : f32
        %51 = vector.broadcast %cst_33 : f32 to vector<8x128xf32>
        %52 = arith.maximumf %50, %51 : vector<8x128xf32>
        %53 = arith.truncf %52 : vector<8x128xf32> to vector<8x128xbf16>
        %cst_34 = arith.constant dense<0.000000e+00> : vector<8x128xf32>
        %54 = tpu.matmul %53, %4, %cst_34 {dimension_numbers = #tpu.dot_dimension_numbers<[1], [0], [0], [1], [0, 0, 1, 1], [], []>} : vector<8x128xbf16>, vector<128x128xbf16>, vector<8x128xf32> -> vector<8x128xf32>
        %55 = arith.addf %54, %18 : vector<8x128xf32>
        %cst_35 = arith.constant 0.000000e+00 : f32
        %56 = vector.broadcast %cst_35 : f32 to vector<8x128xf32>
        %57 = arith.maximumf %55, %56 : vector<8x128xf32>
        %58 = arith.truncf %57 : vector<8x128xf32> to vector<8x128xbf16>
        %cst_36 = arith.constant dense<0.000000e+00> : vector<8x128xf32>
        %59 = tpu.matmul %58, %4, %cst_36 {dimension_numbers = #tpu.dot_dimension_numbers<[1], [0], [0], [1], [0, 0, 1, 1], [], []>} : vector<8x128xbf16>, vector<128x128xbf16>, vector<8x128xf32> -> vector<8x128xf32>
        %60 = arith.addf %59, %18 : vector<8x128xf32>
        %cst_37 = arith.constant 0.000000e+00 : f32
        %61 = vector.broadcast %cst_37 : f32 to vector<8x128xf32>
        %62 = arith.maximumf %60, %61 : vector<8x128xf32>
        %63 = arith.truncf %62 : vector<8x128xf32> to vector<8x128xbf16>
        %cst_38 = arith.constant dense<0.000000e+00> : vector<8x128xf32>
        %64 = tpu.matmul %63, %4, %cst_38 {dimension_numbers = #tpu.dot_dimension_numbers<[1], [0], [0], [1], [0, 0, 1, 1], [], []>} : vector<8x128xbf16>, vector<128x128xbf16>, vector<8x128xf32> -> vector<8x128xf32>
        %65 = arith.addf %64, %18 : vector<8x128xf32>
        %cst_39 = arith.constant 0.000000e+00 : f32
        %66 = vector.broadcast %cst_39 : f32 to vector<8x128xf32>
        %67 = arith.maximumf %65, %66 : vector<8x128xf32>
        %68 = arith.subf %67, %62 : vector<8x128xf32>
        %69 = math.absf %68 : vector<8x128xf32>
        %70 = vector.shape_cast %69 : vector<8x128xf32> to vector<1x8x128xf32>
        %cst_40 = arith.constant dense<0xFF800000> : vector<1xf32>
        %71 = vector.multi_reduction <maximumf>, %70, %cst_40 [1, 2] : vector<1x8x128xf32> to vector<1xf32>
        %72 = vector.shape_cast %71 : vector<1xf32> to vector<1x1x1xf32>
        %73 = vector.extract %72[0, 0, 0] : f32 from vector<1x1x1xf32>
        %c8_i32_41 = arith.constant 8 : i32
        %74 = arith.addi %arg12, %c8_i32_41 : i32
        scf.yield %74, %73, %67 : i32, f32, vector<8x128xf32>
      }
      %cst_20 = arith.constant 0x7F800000 : f32
      %21:3 = scf.while (%arg12 = %20#0, %arg13 = %cst_20, %arg14 = %20#2) : (i32, f32, vector<8x128xf32>) -> (i32, f32, vector<8x128xf32>) {
        %c300_i32 = arith.constant 300 : i32
        %28 = arith.cmpi slt, %arg12, %c300_i32 : i32
        %cst_24 = arith.constant 3.000000e-06 : f32
        %29 = arith.cmpf oge, %arg13, %cst_24 : f32
        %30 = arith.andi %28, %29 : i1
        scf.condition(%30) %arg12, %arg13, %arg14 : i32, f32, vector<8x128xf32>
      } do {
      ^bb0(%arg12: i32, %arg13: f32, %arg14: vector<8x128xf32>):
        %cst_24 = arith.constant dense<0.000000e+00> : vector<8x128xf32>
        %28 = tpu.matmul %arg14, %3, %cst_24 {dimension_numbers = #tpu.dot_dimension_numbers<[1], [0], [0], [1], [0, 0, 1, 1], [], []>} : vector<8x128xf32>, vector<128x128xf32>, vector<8x128xf32> -> vector<8x128xf32>
        %29 = arith.addf %28, %18 : vector<8x128xf32>
        %cst_25 = arith.constant 0.000000e+00 : f32
        %30 = vector.broadcast %cst_25 : f32 to vector<8x128xf32>
        %31 = arith.maximumf %29, %30 : vector<8x128xf32>
        %cst_26 = arith.constant dense<0.000000e+00> : vector<8x128xf32>
        %32 = tpu.matmul %31, %3, %cst_26 {dimension_numbers = #tpu.dot_dimension_numbers<[1], [0], [0], [1], [0, 0, 1, 1], [], []>} : vector<8x128xf32>, vector<128x128xf32>, vector<8x128xf32> -> vector<8x128xf32>
        %33 = arith.addf %32, %18 : vector<8x128xf32>
        %cst_27 = arith.constant 0.000000e+00 : f32
        %34 = vector.broadcast %cst_27 : f32 to vector<8x128xf32>
        %35 = arith.maximumf %33, %34 : vector<8x128xf32>
        %cst_28 = arith.constant dense<0.000000e+00> : vector<8x128xf32>
        %36 = tpu.matmul %35, %3, %cst_28 {dimension_numbers = #tpu.dot_dimension_numbers<[1], [0], [0], [1], [0, 0, 1, 1], [], []>} : vector<8x128xf32>, vector<128x128xf32>, vector<8x128xf32> -> vector<8x128xf32>
        %37 = arith.addf %36, %18 : vector<8x128xf32>
        %cst_29 = arith.constant 0.000000e+00 : f32
        %38 = vector.broadcast %cst_29 : f32 to vector<8x128xf32>
        %39 = arith.maximumf %37, %38 : vector<8x128xf32>
        %cst_30 = arith.constant dense<0.000000e+00> : vector<8x128xf32>
        %40 = tpu.matmul %39, %3, %cst_30 {dimension_numbers = #tpu.dot_dimension_numbers<[1], [0], [0], [1], [0, 0, 1, 1], [], []>} : vector<8x128xf32>, vector<128x128xf32>, vector<8x128xf32> -> vector<8x128xf32>
        %41 = arith.addf %40, %18 : vector<8x128xf32>
        %cst_31 = arith.constant 0.000000e+00 : f32
        %42 = vector.broadcast %cst_31 : f32 to vector<8x128xf32>
        %43 = arith.maximumf %41, %42 : vector<8x128xf32>
        %cst_32 = arith.constant dense<0.000000e+00> : vector<8x128xf32>
        %44 = tpu.matmul %43, %3, %cst_32 {dimension_numbers = #tpu.dot_dimension_numbers<[1], [0], [0], [1], [0, 0, 1, 1], [], []>} : vector<8x128xf32>, vector<128x128xf32>, vector<8x128xf32> -> vector<8x128xf32>
        %45 = arith.addf %44, %18 : vector<8x128xf32>
        %cst_33 = arith.constant 0.000000e+00 : f32
        %46 = vector.broadcast %cst_33 : f32 to vector<8x128xf32>
        %47 = arith.maximumf %45, %46 : vector<8x128xf32>
        %cst_34 = arith.constant dense<0.000000e+00> : vector<8x128xf32>
        %48 = tpu.matmul %47, %3, %cst_34 {dimension_numbers = #tpu.dot_dimension_numbers<[1], [0], [0], [1], [0, 0, 1, 1], [], []>} : vector<8x128xf32>, vector<128x128xf32>, vector<8x128xf32> -> vector<8x128xf32>
        %49 = arith.addf %48, %18 : vector<8x128xf32>
        %cst_35 = arith.constant 0.000000e+00 : f32
        %50 = vector.broadcast %cst_35 : f32 to vector<8x128xf32>
        %51 = arith.maximumf %49, %50 : vector<8x128xf32>
        %cst_36 = arith.constant dense<0.000000e+00> : vector<8x128xf32>
        %52 = tpu.matmul %51, %3, %cst_36 {dimension_numbers = #tpu.dot_dimension_numbers<[1], [0], [0], [1], [0, 0, 1, 1], [], []>} : vector<8x128xf32>, vector<128x128xf32>, vector<8x128xf32> -> vector<8x128xf32>
        %53 = arith.addf %52, %18 : vector<8x128xf32>
        %cst_37 = arith.constant 0.000000e+00 : f32
        %54 = vector.broadcast %cst_37 : f32 to vector<8x128xf32>
        %55 = arith.maximumf %53, %54 : vector<8x128xf32>
        %cst_38 = arith.constant dense<0.000000e+00> : vector<8x128xf32>
        %56 = tpu.matmul %55, %3, %cst_38 {dimension_numbers = #tpu.dot_dimension_numbers<[1], [0], [0], [1], [0, 0, 1, 1], [], []>} : vector<8x128xf32>, vector<128x128xf32>, vector<8x128xf32> -> vector<8x128xf32>
        %57 = arith.addf %56, %18 : vector<8x128xf32>
        %cst_39 = arith.constant 0.000000e+00 : f32
        %58 = vector.broadcast %cst_39 : f32 to vector<8x128xf32>
        %59 = arith.maximumf %57, %58 : vector<8x128xf32>
        %60 = arith.subf %59, %55 : vector<8x128xf32>
        %61 = math.absf %60 : vector<8x128xf32>
        %62 = vector.shape_cast %61 : vector<8x128xf32> to vector<1x8x128xf32>
        %cst_40 = arith.constant dense<0xFF800000> : vector<1xf32>
        %63 = vector.multi_reduction <maximumf>, %62, %cst_40 [1, 2] : vector<1x8x128xf32> to vector<1xf32>
        %64 = vector.shape_cast %63 : vector<1xf32> to vector<1x1x1xf32>
        %65 = vector.extract %64[0, 0, 0] : f32 from vector<1x1x1xf32>
        %c8_i32_41 = arith.constant 8 : i32
        %66 = arith.addi %arg12, %c8_i32_41 : i32
        scf.yield %66, %65, %59 : i32, f32, vector<8x128xf32>
      }
      %cst_21 = arith.constant dense<0.000000e+00> : vector<8x32xf32>
      %22 = tpu.matmul %21#2, %6, %cst_21 {dimension_numbers = #tpu.dot_dimension_numbers<[1], [0], [0], [1], [0, 0, 1, 1], [], []>} : vector<8x128xf32>, vector<128x32xf32>, vector<8x32xf32> -> vector<8x32xf32>
      %23 = arith.addf %22, %19 : vector<8x32xf32>
      %24 = arith.index_cast %arg9 : i32 to index
      %c0_22 = arith.constant 0 : index
      %c0_23 = arith.constant 0 : index
      %25 = vector.load %arg6[%24, %c0_22, %c0_23] : memref<8x8x32xf32, #tpu.memory_space<vmem>>, vector<1x8x32xf32>
      %26 = vector.shape_cast %25 : vector<1x8x32xf32> to vector<8x32xf32>
      %27 = vector.shape_cast %23 : vector<8x32xf32> to vector<1x8x32xf32>
      tpu.vector_store %arg6[%24, %c0_22, %c0_23], %27 {strides = array<i32>} : memref<8x8x32xf32, #tpu.memory_space<vmem>>, vector<1x8x32xf32>,
      scf.yield %23, %21#2 : vector<8x32xf32>, vector<8x128xf32>
    }
    %c8_i32_11 = arith.constant 8 : i32
    %c0_12 = arith.constant 0 : index
    %c0_13 = arith.constant 0 : index
    %11 = vector.load %arg7[%c0_12, %c0_13] : memref<8x32xf32, #tpu.memory_space<vmem>>, vector<8x32xf32>
    tpu.vector_store %arg7[%c0_12, %c0_13], %10#0 {strides = array<i32>} : memref<8x32xf32, #tpu.memory_space<vmem>>, vector<8x32xf32>,
    %c0_14 = arith.constant 0 : index
    %c0_15 = arith.constant 0 : index
    %12 = vector.load %arg8[%c0_14, %c0_15] : memref<8x128xf32, #tpu.memory_space<vmem>>, vector<8x128xf32>
    tpu.vector_store %arg8[%c0_14, %c0_15], %10#1 {strides = array<i32>} : memref<8x128xf32, #tpu.memory_space<vmem>>, vector<8x128xf32>,
    return
  }
  func.func @transform_0(%arg0: i32, %arg1: i32) -> (i32, i32, i32) {
    %c0_i32 = arith.constant 0 : i32
    %c0_i32_0 = arith.constant 0 : i32
    return %arg1, %arg0, %c0_i32 : i32, i32, i32
  }
  func.func @transform_1(%arg0: i32, %arg1: i32) -> (i32, i32) {
    %c0_i32 = arith.constant 0 : i32
    %c0_i32_0 = arith.constant 0 : i32
    %c0_i32_1 = arith.constant 0 : i32
    return %c0_i32, %c0_i32_0 : i32, i32
  }
  func.func @transform_2(%arg0: i32, %arg1: i32) -> (i32, i32) {
    %c0_i32 = arith.constant 0 : i32
    %c0_i32_0 = arith.constant 0 : i32
    %c0_i32_1 = arith.constant 0 : i32
    return %c0_i32, %c0_i32_0 : i32, i32
  }
  func.func @transform_3(%arg0: i32, %arg1: i32) -> (i32, i32) {
    %c0_i32 = arith.constant 0 : i32
    %c0_i32_0 = arith.constant 0 : i32
    %c0_i32_1 = arith.constant 0 : i32
    return %c0_i32, %c0_i32_0 : i32, i32
  }
  func.func @transform_4(%arg0: i32, %arg1: i32) -> (i32, i32, i32) {
    %c0_i32 = arith.constant 0 : i32
    %c0_i32_0 = arith.constant 0 : i32
    return %arg1, %arg0, %c0_i32 : i32, i32, i32
  }
  func.func @transform_5(%arg0: i32, %arg1: i32) -> (i32, i32) {
    %c0_i32 = arith.constant 0 : i32
    %c0_i32_0 = arith.constant 0 : i32
    return %arg0, %c0_i32 : i32, i32
  }
}

</mosaic_0001>

<llo_original>
// kernel: tpu_custom_call.1
$region0: #{tpu_custom_call.1}
  #allocation0 [shape = 'u32[]', space=smem, size = 0x4, offset = 0x4, fixed_abs, tag = 'smem constant byte address 0x4 - core index']
  #allocation1 [shape = 'u32[144,128]{1,0:T(1,128)}', space=vmem, size = 0x12000, scoped, tag = 'internal scratch']
  #allocation2 [shape = 'f32[8,128]{1,0:T(8,128)}', space=vmem, size = 0x1000, scoped, tag = 'scratch operand']
  %s0 = inlined_call_operand.hbm [shape: f32[16,16,160], index: 0, kind: input, shape index: {}]
  %s1 = inlined_call_operand.vmem [shape: f32[128,128], index: 1, kind: input, shape index: {}]
  %s2 = inlined_call_operand.hbm [shape: f32[32,160], index: 2, kind: input, shape index: {}]
  %s3 = inlined_call_operand.vmem [shape: f32[128,32], index: 3, kind: input, shape index: {}]
  %s4 = inlined_call_operand.hbm [shape: f32[16,16,32], index: 4, kind: output, shape index: {0}]
  %s5 = inlined_call_operand.hbm [shape: f32[16,32], index: 5, kind: output, shape index: {1}]
  %6 = xla_tuple %s4, %s5
  %s7 = sld [smem:[#allocation0]]
  $region90: #{tpu_custom_call.1} parent=0
    _
  %s9 = ssub.s32 1, %s7
  %s10 = scalar_select 0, %s9, %s7
  $region1: #{tpu_custom_call.1} parent=0
    #allocation3 [shape = 'u8[131072]{0}', space=vmem, size = 0x20000, scoped, tag = 'input window, operand 0']
    #allocation4 [shape = 's32[2]{0}', space=sflag, size = 0x8, scoped, tag = 'scoped memory for tpu_custom_call.1']
    #allocation5 [shape = 's32[2]{0}', space=sflag, size = 0x8, scoped, tag = 'scoped memory for tpu_custom_call.1']
    #allocation6 [shape = 'u8[32768]{0}', space=vmem, size = 0x8000, scoped, tag = 'input window, operand 2, single buffered']
    #allocation7 [shape = 's32[1]{0}', space=sflag, size = 0x4, scoped, tag = 'scoped memory for tpu_custom_call.1']
    #allocation8 [shape = 'u8[65536]{0}', space=vmem, size = 0x10000, scoped, tag = 'output window, operand 0']
    #allocation9 [shape = 'u8[8192]{0}', space=vmem, size = 0x2000, scoped, tag = 'output window, operand 1']
    #allocation10 [shape = 's32[2]{0}', space=sflag, size = 0x8, scoped, tag = 'scoped memory for tpu_custom_call.1']
    %11 = vsyncpa [#allocation4], 0
    %s12 = scalar_lea.sflag [#allocation4], 1
    %13 = vsyncpa %s12, 0
    %14 = vsyncpa [#allocation7], 0
    %15 = vsyncpa [#allocation5], 0
    %s16 = scalar_lea.sflag [#allocation5], 1
    %17 = vsyncpa %s16, 0
    %18 = vsyncpa [#allocation10], 0
    %s19 = scalar_lea.sflag [#allocation10], 1
    %20 = vsyncpa %s19, 0
    loop: start=0, step=1, limit=6
    $region2: #{tpu_custom_call.1} parent=1 // loop_pre_header
      _
    $region3: #{tpu_custom_call.1} parent=1 // loop_header
      %s22 = sphi 0, %s26
      %p23 = scmp.ge.s32.totalorder %s22, 6
      %s29 = sphi 0, %s41
      %s30 = sphi 0, %s37
      %s31 = sphi 0, %s29
      %s32 = sphi 0, %s30
      %s33 = sphi 0, %s31
      %s34 = sphi 0, %s32
      %s46 = sphi 0, %s48
      %s49 = sphi 0, %s46
      %s50 = sphi 0, %s49
      %s66 = sphi 0, %s50
      %s70 = sphi 0, %s70
      %s72 = sphi 0, %s70
      %s73 = sphi 0, %s72
      %s87 = sphi 0, %s73
      %s91 = sphi 0, %s91
      %s93 = sphi 0, %s91
      %s94 = sphi 0, %s93
      %s108 = sphi 0, %s94
      %s112 = sphi 0, %s112
      %s114 = sphi 0, %s112
      %s115 = sphi 0, %s114
      %s129 = sphi 0, %s115
      %s137 = sphi 0, %s139
      %s140 = sphi 0, %s137
      %s141 = sphi 0, %s140
      %s157 = sphi 0, %s141
      %s163 = sphi 0, %s165
      %s166 = sphi 0, %s163
      %s167 = sphi 0, %s166
      %s183 = sphi 0, %s167
    $region4: #{tpu_custom_call.1} parent=1 // loop_header_branch
      %25 = sbr.rel (%p23) target = $region8
    $region5: #{tpu_custom_call.1} parent=1 // loop_body
      %s27 = ssub.s32 %s22, 1
      %s28 = ssub.s32 %s22, 2
      %s35 = sadd.s32 1, %s30
      %p36 = scmp.ge.s32.totalorder %s35, 2
      %s37 = scalar_select %p36, 0, %s35
      %s38 = sadd.s32 1, %s29
      %s39 = scalar_select %p36, %s38, %s29
      %p40 = scmp.ge.s32.totalorder %s39, 2
      %s41 = scalar_select %p40, 0, %s39
      %s42 = ssub.s32 %s30, %s37
      %s43 = ssub.s32 %s29, %s41
      %s44 = sor.u32 %s42, %s43
      %p45 = scmp.eq.s32.totalorder %s44, 0
      %s47 = sadd.s32 %s46, 1
      %s48 = scalar_select %p45, %s46, %s47
      %p51 = pneg %p45
      %p52 = scmp.eq.s32.totalorder %s22, 3
      %p53 = por %p51, %p52
      %p54 = scmp.ne.s32.totalorder %s46, %s49
      %p55 = scmp.eq.s32.totalorder %s22, 0
      %p56 = por %p54, %p55
      %p57 = scmp.ne.s32.totalorder %s46, %s49
      %p58 = scmp.eq.s32.totalorder %s27, 3
      %p59 = por %p57, %p58
      %p60 = scmp.ne.s32.totalorder %s49, %s50
      %p61 = scmp.eq.s32.totalorder %s27, 0
      %p62 = por %p60, %p61
      %p63 = scmp.ne.s32.totalorder %s49, %s50
      %p64 = scmp.eq.s32.totalorder %s28, 3
      %p65 = por %p63, %p64
      %p67 = scmp.ne.s32.totalorder %s50, %s66
      %p68 = scmp.eq.s32.totalorder %s28, 0
      %p69 = por %p67, %p68
      %s71 = sadd.s32 %s70, 1
      %p74 = scmp.eq.s32.totalorder %s22, 3
      %p75 = scmp.ne.s32.totalorder %s70, %s72
      %p76 = scmp.eq.s32.totalorder %s22, 0
      %p77 = por %p75, %p76
      %p78 = scmp.ne.s32.totalorder %s70, %s72
      %p79 = scmp.eq.s32.totalorder %s27, 3
      %p80 = por %p78, %p79
      %p81 = scmp.ne.s32.totalorder %s72, %s73
      %p82 = scmp.eq.s32.totalorder %s27, 0
      %p83 = por %p81, %p82
      %p84 = scmp.ne.s32.totalorder %s72, %s73
      %p85 = scmp.eq.s32.totalorder %s28, 3
      %p86 = por %p84, %p85
      %p88 = scmp.ne.s32.totalorder %s73, %s87
      %p89 = scmp.eq.s32.totalorder %s28, 0
      %p90 = por %p88, %p89
      %s92 = sadd.s32 %s91, 1
      %p95 = scmp.eq.s32.totalorder %s22, 3
      %p96 = scmp.ne.s32.totalorder %s91, %s93
      %p97 = scmp.eq.s32.totalorder %s22, 0
      %p98 = por %p96, %p97
      %p99 = scmp.ne.s32.totalorder %s91, %s93
      %p100 = scmp.eq.s32.totalorder %s27, 3
      %p101 = por %p99, %p100
      %p102 = scmp.ne.s32.totalorder %s93, %s94
      %p103 = scmp.eq.s32.totalorder %s27, 0
      %p104 = por %p102, %p103
      %p105 = scmp.ne.s32.totalorder %s93, %s94
      %p106 = scmp.eq.s32.totalorder %s28, 3
      %p107 = por %p105, %p106
      %p109 = scmp.ne.s32.totalorder %s94, %s108
      %p110 = scmp.eq.s32.totalorder %s28, 0
      %p111 = por %p109, %p110
      %s113 = sadd.s32 %s112, 1
      %p116 = scmp.eq.s32.totalorder %s22, 3
      %p117 = scmp.ne.s32.totalorder %s112, %s114
      %p118 = scmp.eq.s32.totalorder %s22, 0
      %p119 = por %p117, %p118
      %p120 = scmp.ne.s32.totalorder %s112, %s114
      %p121 = scmp.eq.s32.totalorder %s27, 3
      %p122 = por %p120, %p121
      %p123 = scmp.ne.s32.totalorder %s114, %s115
      %p124 = scmp.eq.s32.totalorder %s27, 0
      %p125 = por %p123, %p124
      %p126 = scmp.ne.s32.totalorder %s114, %s115
      %p127 = scmp.eq.s32.totalorder %s28, 3
      %p128 = por %p126, %p127
      %p130 = scmp.ne.s32.totalorder %s115, %s129
      %p131 = scmp.eq.s32.totalorder %s28, 0
      %p132 = por %p130, %p131
      %s133 = ssub.s32 %s30, %s37
      %s134 = ssub.s32 %s29, %s41
      %s135 = sor.u32 %s133, %s134
      %p136 = scmp.eq.s32.totalorder %s135, 0
      %s138 = sadd.s32 %s137, 1
      %s139 = scalar_select %p136, %s137, %s138
      %p142 = pneg %p136
      %p143 = scmp.eq.s32.totalorder %s22, 3
      %p144 = por %p142, %p143
      %p145 = scmp.ne.s32.totalorder %s137, %s140
      %p146 = scmp.eq.s32.totalorder %s22, 0
      %p147 = por %p145, %p146
      %p148 = scmp.ne.s32.totalorder %s137, %s140
      %p149 = scmp.eq.s32.totalorder %s27, 3
      %p150 = por %p148, %p149
      %p151 = scmp.ne.s32.totalorder %s140, %s141
      %p152 = scmp.eq.s32.totalorder %s27, 0
      %p153 = por %p151, %p152
      %p154 = scmp.ne.s32.totalorder %s140, %s141
      %p155 = scmp.eq.s32.totalorder %s28, 3
      %p156 = por %p154, %p155
      %p158 = scmp.ne.s32.totalorder %s141, %s157
      %p159 = scmp.eq.s32.totalorder %s28, 0
      %p160 = por %p158, %p159
      %s161 = ssub.s32 %s29, %s41
      %p162 = scmp.eq.s32.totalorder %s161, 0
      %s164 = sadd.s32 %s163, 1
      %s165 = scalar_select %p162, %s163, %s164
      %p168 = pneg %p162
      %p169 = scmp.eq.s32.totalorder %s22, 3
      %p170 = por %p168, %p169
      %p171 = scmp.ne.s32.totalorder %s163, %s166
      %p172 = scmp.eq.s32.totalorder %s22, 0
      %p173 = por %p171, %p172
      %p174 = scmp.ne.s32.totalorder %s163, %s166
      %p175 = scmp.eq.s32.totalorder %s27, 3
      %p176 = por %p174, %p175
      %p177 = scmp.ne.s32.totalorder %s166, %s167
      %p178 = scmp.eq.s32.totalorder %s27, 0
      %p179 = por %p177, %p178
      %p180 = scmp.ne.s32.totalorder %s166, %s167
      %p181 = scmp.eq.s32.totalorder %s28, 3
      %p182 = por %p180, %p181
      %p184 = scmp.ne.s32.totalorder %s167, %s183
      %p185 = scmp.eq.s32.totalorder %s28, 0
      %p186 = por %p184, %p185
      %p187 = scmp.le.s32.totalorder 1, %s22
      %p188 = scmp.lt.s32.totalorder %s22, 5
      %p189 = pnand %p187, %p188
      %p190 = pneg %p189
      // Predicated region
      $region9: #{tpu_custom_call.1} parent=5 // pred_check
        _
      $region10: #{tpu_custom_call.1} parent=5 // pred_check_branch
        %192 = sbr.rel (%p189) target = $region12
      $region11: #{tpu_custom_call.1} parent=5 // pred_region
        %s193 = ssub.s32 %s22, 1
        // Predicated region
        $region13: #{tpu_custom_call.1} parent=11 // pred_check
          %p194 = pneg %p83
        $region14: #{tpu_custom_call.1} parent=11 // pred_check_branch
          %196 = sbr.rel (%p194) target = $region16
        $region15: #{tpu_custom_call.1} parent=11 // pred_region
          _
        $region16: #{tpu_custom_call.1} parent=11 // pred_fallthru
          _
        // Predicated region
        $region17: #{tpu_custom_call.1} parent=11 // pred_check
          %p197 = pneg %p104
        $region18: #{tpu_custom_call.1} parent=11 // pred_check_branch
          %199 = sbr.rel (%p197) target = $region20
        $region19: #{tpu_custom_call.1} parent=11 // pred_region
          %s201 = ssub.s32 1024, 1024
          %202 = vsyncadd [#allocation7], %s201
          %s203 = sshll.u32 [#allocation6], 4
          %s204 = int_to_ptr.vmem [resolvable:$true] %s203
          %209 = dma.hbm_to_vmem [thread:$0]  %s2, 1024, %s204, [#allocation7], 256, 256, 16
        $region20: #{tpu_custom_call.1} parent=11 // pred_fallthru
          _
        // Predicated region
        $region21: #{tpu_custom_call.1} parent=11 // pred_check
          %p210 = pneg %p125
        $region22: #{tpu_custom_call.1} parent=11 // pred_check_branch
          %212 = sbr.rel (%p210) target = $region24
        $region23: #{tpu_custom_call.1} parent=11 // pred_region
          _
        $region24: #{tpu_custom_call.1} parent=11 // pred_fallthru
          _
      $region12: #{tpu_custom_call.1} parent=5 // pred_fallthru
        _
      %p213 = scmp.lt.s32.totalorder %s22, 4
      // Predicated region
      $region25: #{tpu_custom_call.1} parent=5 // pred_check
        %p214 = pneg %p213
      $region26: #{tpu_custom_call.1} parent=5 // pred_check_branch
        %216 = sbr.rel (%p214) target = $region28
      $region27: #{tpu_custom_call.1} parent=5 // pred_region
        // Predicated region
        $region29: #{tpu_custom_call.1} parent=27 // pred_check
          %p217 = pneg %p56
        $region30: #{tpu_custom_call.1} parent=27 // pred_check_branch
          %219 = sbr.rel (%p217) target = $region32
        $region31: #{tpu_custom_call.1} parent=27 // pred_region
          %s220 = sand.u32 %s46, 1
          %s221 = scalar_lea.sflag [#allocation4], %s220
          %s222 = sand.u32 %s46, 1
          %s223 = smul.addr %s222, 128
          %s224 = scalar_lea.vmem [#allocation3], %s223
          %s225 = smul.u32 8, %s30
          %s227 = ssub.s32 2048, 2048
          %228 = vsyncadd %s221, %s227
          %s229 = smul.addr %s29, 2
          %s230 = smul.addr %s225, 4
          %s231 = sadd.s32 %s229, %s230
          %s232 = smul.addr %s231, 128
          %s233 = scalar_lea.hbm %s0, %s232
          %s234 = sshll.u32 %s224, 4
          %s235 = int_to_ptr.vmem [resolvable:$true] %s234
          %240 = dma.hbm_to_vmem [thread:$0]  %s233, 2048, %s235, %s221, 512, 256, 16
        $region32: #{tpu_custom_call.1} parent=27 // pred_fallthru
          _
      $region28: #{tpu_custom_call.1} parent=5 // pred_fallthru
        _
      %p241 = scmp.le.s32.totalorder 1, %s22
      %p242 = scmp.lt.s32.totalorder %s22, 5
      %p243 = pnand %p241, %p242
      %p244 = pneg %p243
      // Predicated region
      $region33: #{tpu_custom_call.1} parent=5 // pred_check
        _
      $region34: #{tpu_custom_call.1} parent=5 // pred_check_branch
        %246 = sbr.rel (%p243) target = $region36
      $region35: #{tpu_custom_call.1} parent=5 // pred_region
        %s247 = ssub.s32 %s22, 1
        %s248 = sand.u32 %s49, 1
        %s249 = scalar_lea.sflag [#allocation4], %s248
        %s250 = sand.u32 %s49, 1
        %s251 = smul.addr %s250, 128
        %s252 = scalar_lea.vmem [#allocation3], %s251
        // Predicated region
        $region37: #{tpu_custom_call.1} parent=35 // pred_check
          %p253 = pneg %p62
        $region38: #{tpu_custom_call.1} parent=35 // pred_check_branch
          %255 = sbr.rel (%p253) target = $region40
        $region39: #{tpu_custom_call.1} parent=35 // pred_region
          %256 = dma.done %s249, 2048
        $region40: #{tpu_custom_call.1} parent=35 // pred_fallthru
          _
        // Predicated region
        $region41: #{tpu_custom_call.1} parent=35 // pred_check
          %p257 = pneg %p104
        $region42: #{tpu_custom_call.1} parent=35 // pred_check_branch
          %259 = sbr.rel (%p257) target = $region44
        $region43: #{tpu_custom_call.1} parent=35 // pred_region
          %260 = dma.done [#allocation7], 1024
        $region44: #{tpu_custom_call.1} parent=35 // pred_fallthru
          _
        %s261 = sand.u32 %s49, 1
        %s262 = scalar_lea.sflag [#allocation4], %s261
        %s263 = sand.u32 %s49, 1
        %s264 = smul.addr %s263, 128
        %s265 = scalar_lea.vmem [#allocation3], %s264
        %p266 = pneg %p62
        %p267 = pneg %p59
        %p268 = pneg %p83
        %p269 = pneg %p80
        %p270 = pneg %p104
        %p271 = pneg %p101
        %p272 = pneg %p125
        %p273 = pneg %p122
        %p274 = pneg %p153
        %p275 = pneg %p150
        %s276 = sand.u32 %s140, 1
        %s277 = scalar_lea.sflag [#allocation5], %s276
        %s278 = sand.u32 %s140, 1
        %s279 = smul.addr %s278, 64
        %s280 = scalar_lea.vmem [#allocation8], %s279
        %p281 = pneg %p179
        %p282 = pneg %p176
        %s283 = sand.u32 %s166, 1
        %s284 = scalar_lea.sflag [#allocation10], %s283
        %s285 = sand.u32 %s166, 1
        %s286 = smul.addr %s285, 8
        %s287 = scalar_lea.vmem [#allocation9], %s286
        %s288 = smul.u32 8, %s32
        %s289 = smul.u32 8, %s32
        %p291 = scmp.eq.s32.totalorder %s32, 0
        // Predicated region
        $region45: #{tpu_custom_call.1} parent=35 // pred_check
          %p292 = pneg %p291
        $region46: #{tpu_custom_call.1} parent=35 // pred_check_branch
          %294 = sbr.rel (%p292) target = $region48
        $region47: #{tpu_custom_call.1} parent=35 // pred_region
          %vm295 = vcmask 261120
          %296 = vst.msk [vmem:[%s287] sm:$0xff] %vm295, 0.0
          %297 = vst [vmem:[#allocation2] sm:$0xff] 0.0
        $region48: #{tpu_custom_call.1} parent=35 // pred_fallthru
          _
        %v298 = vld [vmem:[%s1] sm:$0xff]
        %v299 = vld [vmem:[%s1 + $0x8] sm:$0xff]
        %v300 = vld [vmem:[%s1 + $0x10] sm:$0xff]
        %v301 = vld [vmem:[%s1 + $0x18] sm:$0xff]
        %v302 = vld [vmem:[%s1 + $0x20] sm:$0xff]
        %v303 = vld [vmem:[%s1 + $0x28] sm:$0xff]
        %v304 = vld [vmem:[%s1 + $0x30] sm:$0xff]
        %v305 = vld [vmem:[%s1 + $0x38] sm:$0xff]
        %v306 = vld [vmem:[%s1 + $0x40] sm:$0xff]
        %v307 = vld [vmem:[%s1 + $0x48] sm:$0xff]
        %v308 = vld [vmem:[%s1 + $0x50] sm:$0xff]
        %v309 = vld [vmem:[%s1 + $0x58] sm:$0xff]
        %v310 = vld [vmem:[%s1 + $0x60] sm:$0xff]
        %v311 = vld [vmem:[%s1 + $0x68] sm:$0xff]
        %v312 = vld [vmem:[%s1 + $0x70] sm:$0xff]
        %v313 = vld [vmem:[%s1 + $0x78] sm:$0xff]
        %v314 = vpack.c.bf16 %v299, %v298
        %v315 = vpack.c.bf16 %v301, %v300
        %v316 = vpack.c.bf16 %v303, %v302
        %v317 = vpack.c.bf16 %v305, %v304
        %v318 = vpack.c.bf16 %v307, %v306
        %v319 = vpack.c.bf16 %v309, %v308
        %v320 = vpack.c.bf16 %v311, %v310
        %v321 = vpack.c.bf16 %v313, %v312
        %v322 = vld [vmem:[#allocation6] sm:$0xff]
        %v323 = vld [vmem:[#allocation6 + $0x8] sm:$0xff]
        %v324 = vld [vmem:[#allocation6 + $0x10] sm:$0xff]
        %v325 = vld [vmem:[#allocation6 + $0x18] sm:$0xff]
        %v326 = vld [vmem:[#allocation6 + $0x20] sm:$0xff]
        %v327 = vld [vmem:[#allocation6 + $0x28] sm:$0xff]
        %v328 = vld [vmem:[#allocation6 + $0x30] sm:$0xff]
        %v329 = vld [vmem:[#allocation6 + $0x38] sm:$0xff]
        %v330 = vld [vmem:[%s3] sm:$0xff]
        %v331 = vld [vmem:[%s3 + $0x8] sm:$0xff]
        %v332 = vld [vmem:[%s3 + $0x10] sm:$0xff]
        %v333 = vld [vmem:[%s3 + $0x18] sm:$0xff]
        %v334 = vld [vmem:[%s3 + $0x20] sm:$0xff]
        %v335 = vld [vmem:[%s3 + $0x28] sm:$0xff]
        %v336 = vld [vmem:[%s3 + $0x30] sm:$0xff]
        %v337 = vld [vmem:[%s3 + $0x38] sm:$0xff]
        %v338 = vld [vmem:[%s3 + $0x40] sm:$0xff]
        %v339 = vld [vmem:[%s3 + $0x48] sm:$0xff]
        %v340 = vld [vmem:[%s3 + $0x50] sm:$0xff]
        %v341 = vld [vmem:[%s3 + $0x58] sm:$0xff]
        %v342 = vld [vmem:[%s3 + $0x60] sm:$0xff]
        %v343 = vld [vmem:[%s3 + $0x68] sm:$0xff]
        %v344 = vld [vmem:[%s3 + $0x70] sm:$0xff]
        %v345 = vld [vmem:[%s3 + $0x78] sm:$0xff]
        %v346 = vld [vmem:[%s287] sm:$0xff]
        %v347 = vld [vmem:[#allocation2] sm:$0xff]
        loop: start=0, step=1, limit=8
        $region49: #{tpu_custom_call.1} parent=35 // loop_pre_header
          _
        $region50: #{tpu_custom_call.1} parent=35 // loop_header
          %s349 = sphi 0, %s353
          %p350 = scmp.ge.s32.totalorder %s349, 8
          %v354 = vphi %v346, %v1453
          %v355 = vphi %v347, %v799
        $region51: #{tpu_custom_call.1} parent=35 // loop_header_branch
          %352 = sbr.rel (%p350) target = $region55
        $region52: #{tpu_custom_call.1} parent=35 // loop_body
          %s356 = smul.u32 %s349, 2
          %s357 = smul.addr %s356, 8
          %s358 = scalar_lea.vmem %s252, %s357 [#allocation3]
          %v359 = vld [vmem:[%s358] sm:$0xff]
          %v360 = vld [vmem:[%s358 + $0x8] sm:$0xff]
          %vm361 = vcmask 261120
          %v363 = vsel %vm361, %v354, 0
          %365 = vmatprep.subr.mxu0 %v323
          %366 = vmatpush1.msra.mxu0 %v322
          %367 = vmatprep.subr.mxu0 %v325
          %368 = vmatpush1.msra.mxu0 %v324
          %369 = vmatprep.subr.mxu0 %v327
          %370 = vmatpush1.msra.mxu0 %v326
          %371 = vmatprep.subr.mxu0 %v329
          %372 = vmatpush1.msra.mxu0 %v328
          %373 = vmatprep.subr.mxu0 0.0
          %374 = vmatpush1.msra.mxu0 0.0
          %375 = vmatprep.subr.mxu0 0.0
          %376 = vmatpush1.msra.mxu0 0.0
          %377 = vmatprep.subr.mxu0 0.0
          %378 = vmatpush1.msra.mxu0 0.0
          %379 = vmatprep.subr.mxu0 0.0
          %380 = vmatpush1.msra.mxu0 0.0
          %381 = vmatprep.subr.mxu0 0.0
          %382 = vmatpush1.msra.mxu0 0.0
          %383 = vmatprep.subr.mxu0 0.0
          %384 = vmatpush1.msra.mxu0 0.0
          %385 = vmatprep.subr.mxu0 0.0
          %386 = vmatpush1.msra.mxu0 0.0
          %387 = vmatprep.subr.mxu0 0.0
          %388 = vmatpush1.msra.mxu0 0.0
          %389 = vmatprep.subr.mxu0 0.0
          %390 = vmatpush1.msra.mxu0 0.0
          %391 = vmatprep.subr.mxu0 0.0
          %392 = vmatpush1.msra.mxu0 0.0
          %393 = vmatprep.subr.mxu0 0.0
          %394 = vmatpush1.msra.mxu0 0.0
          %395 = vmatprep.subr.mxu0 0.0
          %396 = vmatpush1.msra.mxu0 0.0
          %397 = vmatprep.subr.mxu0 0.0
          %398 = vmatpush1.msra.mxu0 0.0
          %399 = vmatprep.subr.mxu0 0.0
          %400 = vmatpush1.msra.mxu0 0.0
          %401 = vmatprep.subr.mxu0 0.0
          %402 = vmatpush1.msra.mxu0 0.0
          %403 = vmatprep.subr.mxu0 0.0
          %404 = vmatpush1.msra.mxu0 0.0
          %405 = vmatprep.subr.mxu0 0.0
          %406 = vmatpush1.msra.mxu0 0.0
          %407 = vmatprep.subr.mxu0 0.0
          %408 = vmatpush1.msra.mxu0 0.0
          %409 = vmatprep.subr.mxu0 0.0
          %410 = vmatpush1.msra.mxu0 0.0
          %411 = vmatprep.subr.mxu0 0.0
          %412 = vmatpush1.msra.mxu0 0.0
          %413 = vmatprep.subr.mxu0 0.0
          %414 = vmatpush1.msra.mxu0 0.0
          %415 = vmatprep.subr.mxu0 0.0
          %416 = vmatpush1.msra.mxu0 0.0
          %417 = vmatprep.subr.mxu0 0.0
          %418 = vmatpush1.msra.mxu0 0.0
          %419 = vmatprep.subr.mxu0 0.0
          %420 = vmatpush1.msra.mxu0 0.0
          %421 = vmatprep.subr.mxu0 0.0
          %422 = vmatpush1.msra.mxu0 0.0
          %423 = vmatprep.subr.mxu0 0.0
          %424 = vmatpush1.msra.mxu0 0.0
          %425 = vmatprep.subr.mxu0 0.0
          %426 = vmatpush1.msra.mxu0 0.0
          %427 = vmatprep.subr.mxu0 0.0
          %428 = vmatpush1.msra.mxu0 0.0
          %429 = vmatprep.mubr.f32.mxu0 0.0
          %430 = vmatmul.mubr.f32.gmra.mrb[0].mxu0 %v363
          %v431 = vpop.f32.mrb[0].mxu0
          %v432 = vadd.f32 0.0, %v431
          %v433 = vpop.f32.mrb[0].mxu0
          %v434 = vadd.f32 0.0, %v433
          %435 = vdwg.mxu0
          %v436 = vadd.f32 %v359, %v432
          %v437 = vadd.f32 %v360, %v434
          // While loop
          $region56: #{tpu_custom_call.1} parent=52 // loop_pre_header
            _
          $region57: #{tpu_custom_call.1} parent=52 // loop_header
            %s439 = sphi 0, %s795
            %s440 = sphi inf, %s794
            %v441 = vphi %v355, %v783
            %p442 = scmp.lt.s32.totalorder %s439, 160
            %p443 = scmp.ge.f32.partialorder %s440, 0.01
            %p444 = pnand %p442, %p443
            %p445 = pneg %p444
          $region58: #{tpu_custom_call.1} parent=52 // loop_header_branch
            %447 = sbr.rel (%p444) target = $region62
          $region59: #{tpu_custom_call.1} parent=52 // loop_body
            %v448 = vpack.c.bf16 %v441, %v441
            %449 = vmatprep.subr.bf16.mxu0 0
            %450 = vmatpush1.bf16.msra.mxu0 %v314
            %451 = vmatprep.subr.bf16.mxu0 0
            %452 = vmatpush1.bf16.msra.mxu0 %v315
            %453 = vmatprep.subr.bf16.mxu0 0
            %454 = vmatpush1.bf16.msra.mxu0 %v316
            %455 = vmatprep.subr.bf16.mxu0 0
            %456 = vmatpush1.bf16.msra.mxu0 %v317
            %457 = vmatprep.subr.bf16.mxu0 0
            %458 = vmatpush1.bf16.msra.mxu0 %v318
            %459 = vmatprep.subr.bf16.mxu0 0
            %460 = vmatpush1.bf16.msra.mxu0 %v319
            %461 = vmatprep.subr.bf16.mxu0 0
            %462 = vmatpush1.bf16.msra.mxu0 %v320
            %463 = vmatprep.subr.bf16.mxu0 0
            %464 = vmatpush1.bf16.msra.mxu0 %v321
            %465 = vmatprep.subr.bf16.mxu0 0
            %466 = vmatpush1.bf16.msra.mxu0 0
            %467 = vmatprep.subr.bf16.mxu0 0
            %468 = vmatpush1.bf16.msra.mxu0 0
            %469 = vmatprep.subr.bf16.mxu0 0
            %470 = vmatpush1.bf16.msra.mxu0 0
            %471 = vmatprep.subr.bf16.mxu0 0
            %472 = vmatpush1.bf16.msra.mxu0 0
            %473 = vmatprep.subr.bf16.mxu0 0
            %474 = vmatpush1.bf16.msra.mxu0 0
            %475 = vmatprep.subr.bf16.mxu0 0
            %476 = vmatpush1.bf16.msra.mxu0 0
            %477 = vmatprep.subr.bf16.mxu0 0
            %478 = vmatpush1.bf16.msra.mxu0 0
            %479 = vmatprep.subr.bf16.mxu0 0
            %480 = vmatpush1.bf16.msra.mxu0 0
            %481 = vmatprep.mubr.bf16.mxu0 0
            %482 = vmatmul.mubr.bf16.gmra.mrb[0].mxu0 %v448
            %v483 = vpop.f32.mrb[0].mxu0
            %v484 = vadd.f32 %v436, %v483
            %v485 = vpop.f32.mrb[0].mxu0
            %v486 = vpop.f32.mrb[0].mxu0
            %v487 = vpop.f32.mrb[0].mxu0
            %488 = vdwg.mxu0
            %v489 = vmax.f32 %v484, 0.0
            %v490 = vpack.c.bf16 %v489, %v489
            %491 = vmatprep.subr.bf16.mxu0 0
            %492 = vmatpush1.bf16.msra.mxu0 %v314
            %493 = vmatprep.subr.bf16.mxu0 0
            %494 = vmatpush1.bf16.msra.mxu0 %v315
            %495 = vmatprep.subr.bf16.mxu0 0
            %496 = vmatpush1.bf16.msra.mxu0 %v316
            %497 = vmatprep.subr.bf16.mxu0 0
            %498 = vmatpush1.bf16.msra.mxu0 %v317
            %499 = vmatprep.subr.bf16.mxu0 0
            %500 = vmatpush1.bf16.msra.mxu0 %v318
            %501 = vmatprep.subr.bf16.mxu0 0
            %502 = vmatpush1.bf16.msra.mxu0 %v319
            %503 = vmatprep.subr.bf16.mxu0 0
            %504 = vmatpush1.bf16.msra.mxu0 %v320
            %505 = vmatprep.subr.bf16.mxu0 0
            %506 = vmatpush1.bf16.msra.mxu0 %v321
            %507 = vmatprep.subr.bf16.mxu0 0
            %508 = vmatpush1.bf16.msra.mxu0 0
            %509 = vmatprep.subr.bf16.mxu0 0
            %510 = vmatpush1.bf16.msra.mxu0 0
            %511 = vmatprep.subr.bf16.mxu0 0
            %512 = vmatpush1.bf16.msra.mxu0 0
            %513 = vmatprep.subr.bf16.mxu0 0
            %514 = vmatpush1.bf16.msra.mxu0 0
            %515 = vmatprep.subr.bf16.mxu0 0
            %516 = vmatpush1.bf16.msra.mxu0 0
            %517 = vmatprep.subr.bf16.mxu0 0
            %518 = vmatpush1.bf16.msra.mxu0 0
            %519 = vmatprep.subr.bf16.mxu0 0
            %520 = vmatpush1.bf16.msra.mxu0 0
            %521 = vmatprep.subr.bf16.mxu0 0
            %522 = vmatpush1.bf16.msra.mxu0 0
            %523 = vmatprep.mubr.bf16.mxu0 0
            %524 = vmatmul.mubr.bf16.gmra.mrb[0].mxu0 %v490
            %v525 = vpop.f32.mrb[0].mxu0
            %v526 = vadd.f32 %v436, %v525
            %v527 = vpop.f32.mrb[0].mxu0
            %v528 = vpop.f32.mrb[0].mxu0
            %v529 = vpop.f32.mrb[0].mxu0
            %530 = vdwg.mxu0
            %v531 = vmax.f32 %v526, 0.0
            %v532 = vpack.c.bf16 %v531, %v531
            %533 = vmatprep.subr.bf16.mxu0 0
            %534 = vmatpush1.bf16.msra.mxu0 %v314
            %535 = vmatprep.subr.bf16.mxu0 0
            %536 = vmatpush1.bf16.msra.mxu0 %v315
            %537 = vmatprep.subr.bf16.mxu0 0
            %538 = vmatpush1.bf16.msra.mxu0 %v316
            %539 = vmatprep.subr.bf16.mxu0 0
            %540 = vmatpush1.bf16.msra.mxu0 %v317
            %541 = vmatprep.subr.bf16.mxu0 0
            %542 = vmatpush1.bf16.msra.mxu0 %v318
            %543 = vmatprep.subr.bf16.mxu0 0
            %544 = vmatpush1.bf16.msra.mxu0 %v319
            %545 = vmatprep.subr.bf16.mxu0 0
            %546 = vmatpush1.bf16.msra.mxu0 %v320
            %547 = vmatprep.subr.bf16.mxu0 0
            %548 = vmatpush1.bf16.msra.mxu0 %v321
            %549 = vmatprep.subr.bf16.mxu0 0
            %550 = vmatpush1.bf16.msra.mxu0 0
            %551 = vmatprep.subr.bf16.mxu0 0
            %552 = vmatpush1.bf16.msra.mxu0 0
            %553 = vmatprep.subr.bf16.mxu0 0
            %554 = vmatpush1.bf16.msra.mxu0 0
            %555 = vmatprep.subr.bf16.mxu0 0
            %556 = vmatpush1.bf16.msra.mxu0 0
            %557 = vmatprep.subr.bf16.mxu0 0
            %558 = vmatpush1.bf16.msra.mxu0 0
            %559 = vmatprep.subr.bf16.mxu0 0
            %560 = vmatpush1.bf16.msra.mxu0 0
            %561 = vmatprep.subr.bf16.mxu0 0
            %562 = vmatpush1.bf16.msra.mxu0 0
            %563 = vmatprep.subr.bf16.mxu0 0
            %564 = vmatpush1.bf16.msra.mxu0 0
            %565 = vmatprep.mubr.bf16.mxu0 0
            %566 = vmatmul.mubr.bf16.gmra.mrb[0].mxu0 %v532
            %v567 = vpop.f32.mrb[0].mxu0
            %v568 = vadd.f32 %v436, %v567
            %v569 = vpop.f32.mrb[0].mxu0
            %v570 = vpop.f32.mrb[0].mxu0
            %v571 = vpop.f32.mrb[0].mxu0
            %572 = vdwg.mxu0
            %v573 = vmax.f32 %v568, 0.0
            %v574 = vpack.c.bf16 %v573, %v573
            %575 = vmatprep.subr.bf16.mxu0 0
            %576 = vmatpush1.bf16.msra.mxu0 %v314
            %577 = vmatprep.subr.bf16.mxu0 0
            %578 = vmatpush1.bf16.msra.mxu0 %v315
            %579 = vmatprep.subr.bf16.mxu0 0
            %580 = vmatpush1.bf16.msra.mxu0 %v316
            %581 = vmatprep.subr.bf16.mxu0 0
            %582 = vmatpush1.bf16.msra.mxu0 %v317
            %583 = vmatprep.subr.bf16.mxu0 0
            %584 = vmatpush1.bf16.msra.mxu0 %v318
            %585 = vmatprep.subr.bf16.mxu0 0
            %586 = vmatpush1.bf16.msra.mxu0 %v319
            %587 = vmatprep.subr.bf16.mxu0 0
            %588 = vmatpush1.bf16.msra.mxu0 %v320
            %589 = vmatprep.subr.bf16.mxu0 0
            %590 = vmatpush1.bf16.msra.mxu0 %v321
            %591 = vmatprep.subr.bf16.mxu0 0
            %592 = vmatpush1.bf16.msra.mxu0 0
            %593 = vmatprep.subr.bf16.mxu0 0
            %594 = vmatpush1.bf16.msra.mxu0 0
            %595 = vmatprep.subr.bf16.mxu0 0
            %596 = vmatpush1.bf16.msra.mxu0 0
            %597 = vmatprep.subr.bf16.mxu0 0
            %598 = vmatpush1.bf16.msra.mxu0 0
            %599 = vmatprep.subr.bf16.mxu0 0
            %600 = vmatpush1.bf16.msra.mxu0 0
            %601 = vmatprep.subr.bf16.mxu0 0
            %602 = vmatpush1.bf16.msra.mxu0 0
            %603 = vmatprep.subr.bf16.mxu0 0
            %604 = vmatpush1.bf16.msra.mxu0 0
            %605 = vmatprep.subr.bf16.mxu0 0
            %606 = vmatpush1.bf16.msra.mxu0 0
            %607 = vmatprep.mubr.bf16.mxu0 0
            %608 = vmatmul.mubr.bf16.gmra.mrb[0].mxu0 %v574
            %v609 = vpop.f32.mrb[0].mxu0
            %v610 = vadd.f32 %v436, %v609
            %v611 = vpop.f32.mrb[0].mxu0
            %v612 = vpop.f32.mrb[0].mxu0
            %v613 = vpop.f32.mrb[0].mxu0
            %614 = vdwg.mxu0
            %v615 = vmax.f32 %v610, 0.0
            %v616 = vpack.c.bf16 %v615, %v615
            %617 = vmatprep.subr.bf16.mxu0 0
            %618 = vmatpush1.bf16.msra.mxu0 %v314
            %619 = vmatprep.subr.bf16.mxu0 0
            %620 = vmatpush1.bf16.msra.mxu0 %v315
            %621 = vmatprep.subr.bf16.mxu0 0
            %622 = vmatpush1.bf16.msra.mxu0 %v316
            %623 = vmatprep.subr.bf16.mxu0 0
            %624 = vmatpush1.bf16.msra.mxu0 %v317
            %625 = vmatprep.subr.bf16.mxu0 0
            %626 = vmatpush1.bf16.msra.mxu0 %v318
            %627 = vmatprep.subr.bf16.mxu0 0
            %628 = vmatpush1.bf16.msra.mxu0 %v319
            %629 = vmatprep.subr.bf16.mxu0 0
            %630 = vmatpush1.bf16.msra.mxu0 %v320
            %631 = vmatprep.subr.bf16.mxu0 0
            %632 = vmatpush1.bf16.msra.mxu0 %v321
            %633 = vmatprep.subr.bf16.mxu0 0
            %634 = vmatpush1.bf16.msra.mxu0 0
            %635 = vmatprep.subr.bf16.mxu0 0
            %636 = vmatpush1.bf16.msra.mxu0 0
            %637 = vmatprep.subr.bf16.mxu0 0
            %638 = vmatpush1.bf16.msra.mxu0 0
            %639 = vmatprep.subr.bf16.mxu0 0
            %640 = vmatpush1.bf16.msra.mxu0 0
            %641 = vmatprep.subr.bf16.mxu0 0
            %642 = vmatpush1.bf16.msra.mxu0 0
            %643 = vmatprep.subr.bf16.mxu0 0
            %644 = vmatpush1.bf16.msra.mxu0 0
            %645 = vmatprep.subr.bf16.mxu0 0
            %646 = vmatpush1.bf16.msra.mxu0 0
            %647 = vmatprep.subr.bf16.mxu0 0
            %648 = vmatpush1.bf16.msra.mxu0 0
            %649 = vmatprep.mubr.bf16.mxu0 0
            %650 = vmatmul.mubr.bf16.gmra.mrb[0].mxu0 %v616
            %v651 = vpop.f32.mrb[0].mxu0
            %v652 = vadd.f32 %v436, %v651
            %v653 = vpop.f32.mrb[0].mxu0
            %v654 = vpop.f32.mrb[0].mxu0
            %v655 = vpop.f32.mrb[0].mxu0
            %656 = vdwg.mxu0
            %v657 = vmax.f32 %v652, 0.0
            %v658 = vpack.c.bf16 %v657, %v657
            %659 = vmatprep.subr.bf16.mxu0 0
            %660 = vmatpush1.bf16.msra.mxu0 %v314
            %661 = vmatprep.subr.bf16.mxu0 0
            %662 = vmatpush1.bf16.msra.mxu0 %v315
            %663 = vmatprep.subr.bf16.mxu0 0
            %664 = vmatpush1.bf16.msra.mxu0 %v316
            %665 = vmatprep.subr.bf16.mxu0 0
            %666 = vmatpush1.bf16.msra.mxu0 %v317
            %667 = vmatprep.subr.bf16.mxu0 0
            %668 = vmatpush1.bf16.msra.mxu0 %v318
            %669 = vmatprep.subr.bf16.mxu0 0
            %670 = vmatpush1.bf16.msra.mxu0 %v319
            %671 = vmatprep.subr.bf16.mxu0 0
            %672 = vmatpush1.bf16.msra.mxu0 %v320
            %673 = vmatprep.subr.bf16.mxu0 0
            %674 = vmatpush1.bf16.msra.mxu0 %v321
            %675 = vmatprep.subr.bf16.mxu0 0
            %676 = vmatpush1.bf16.msra.mxu0 0
            %677 = vmatprep.subr.bf16.mxu0 0
            %678 = vmatpush1.bf16.msra.mxu0 0
            %679 = vmatprep.subr.bf16.mxu0 0
            %680 = vmatpush1.bf16.msra.mxu0 0
            %681 = vmatprep.subr.bf16.mxu0 0
            %682 = vmatpush1.bf16.msra.mxu0 0
            %683 = vmatprep.subr.bf16.mxu0 0
            %684 = vmatpush1.bf16.msra.mxu0 0
            %685 = vmatprep.subr.bf16.mxu0 0
            %686 = vmatpush1.bf16.msra.mxu0 0
            %687 = vmatprep.subr.bf16.mxu0 0
            %688 = vmatpush1.bf16.msra.mxu0 0
            %689 = vmatprep.subr.bf16.mxu0 0
            %690 = vmatpush1.bf16.msra.mxu0 0
            %691 = vmatprep.mubr.bf16.mxu0 0
            %692 = vmatmul.mubr.bf16.gmra.mrb[0].mxu0 %v658
            %v693 = vpop.f32.mrb[0].mxu0
            %v694 = vadd.f32 %v436, %v693
            %v695 = vpop.f32.mrb[0].mxu0
            %v696 = vpop.f32.mrb[0].mxu0
            %v697 = vpop.f32.mrb[0].mxu0
            %698 = vdwg.mxu0
            %v699 = vmax.f32 %v694, 0.0
            %v700 = vpack.c.bf16 %v699, %v699
            %701 = vmatprep.subr.bf16.mxu0 0
            %702 = vmatpush1.bf16.msra.mxu0 %v314
            %703 = vmatprep.subr.bf16.mxu0 0
            %704 = vmatpush1.bf16.msra.mxu0 %v315
            %705 = vmatprep.subr.bf16.mxu0 0
            %706 = vmatpush1.bf16.msra.mxu0 %v316
            %707 = vmatprep.subr.bf16.mxu0 0
            %708 = vmatpush1.bf16.msra.mxu0 %v317
            %709 = vmatprep.subr.bf16.mxu0 0
            %710 = vmatpush1.bf16.msra.mxu0 %v318
            %711 = vmatprep.subr.bf16.mxu0 0
            %712 = vmatpush1.bf16.msra.mxu0 %v319
            %713 = vmatprep.subr.bf16.mxu0 0
            %714 = vmatpush1.bf16.msra.mxu0 %v320
            %715 = vmatprep.subr.bf16.mxu0 0
            %716 = vmatpush1.bf16.msra.mxu0 %v321
            %717 = vmatprep.subr.bf16.mxu0 0
            %718 = vmatpush1.bf16.msra.mxu0 0
            %719 = vmatprep.subr.bf16.mxu0 0
            %720 = vmatpush1.bf16.msra.mxu0 0
            %721 = vmatprep.subr.bf16.mxu0 0
            %722 = vmatpush1.bf16.msra.mxu0 0
            %723 = vmatprep.subr.bf16.mxu0 0
            %724 = vmatpush1.bf16.msra.mxu0 0
            %725 = vmatprep.subr.bf16.mxu0 0
            %726 = vmatpush1.bf16.msra.mxu0 0
            %727 = vmatprep.subr.bf16.mxu0 0
            %728 = vmatpush1.bf16.msra.mxu0 0
            %729 = vmatprep.subr.bf16.mxu0 0
            %730 = vmatpush1.bf16.msra.mxu0 0
            %731 = vmatprep.subr.bf16.mxu0 0
            %732 = vmatpush1.bf16.msra.mxu0 0
            %733 = vmatprep.mubr.bf16.mxu0 0
            %734 = vmatmul.mubr.bf16.gmra.mrb[0].mxu0 %v700
            %v735 = vpop.f32.mrb[0].mxu0
            %v736 = vadd.f32 %v436, %v735
            %v737 = vpop.f32.mrb[0].mxu0
            %v738 = vpop.f32.mrb[0].mxu0
            %v739 = vpop.f32.mrb[0].mxu0
            %740 = vdwg.mxu0
            %v741 = vmax.f32 %v736, 0.0
            %v742 = vpack.c.bf16 %v741, %v741
            %743 = vmatprep.subr.bf16.mxu0 0
            %744 = vmatpush1.bf16.msra.mxu0 %v314
            %745 = vmatprep.subr.bf16.mxu0 0
            %746 = vmatpush1.bf16.msra.mxu0 %v315
            %747 = vmatprep.subr.bf16.mxu0 0
            %748 = vmatpush1.bf16.msra.mxu0 %v316
            %749 = vmatprep.subr.bf16.mxu0 0
            %750 = vmatpush1.bf16.msra.mxu0 %v317
            %751 = vmatprep.subr.bf16.mxu0 0
            %752 = vmatpush1.bf16.msra.mxu0 %v318
            %753 = vmatprep.subr.bf16.mxu0 0
            %754 = vmatpush1.bf16.msra.mxu0 %v319
            %755 = vmatprep.subr.bf16.mxu0 0
            %756 = vmatpush1.bf16.msra.mxu0 %v320
            %757 = vmatprep.subr.bf16.mxu0 0
            %758 = vmatpush1.bf16.msra.mxu0 %v321
            %759 = vmatprep.subr.bf16.mxu0 0
            %760 = vmatpush1.bf16.msra.mxu0 0
            %761 = vmatprep.subr.bf16.mxu0 0
            %762 = vmatpush1.bf16.msra.mxu0 0
            %763 = vmatprep.subr.bf16.mxu0 0
            %764 = vmatpush1.bf16.msra.mxu0 0
            %765 = vmatprep.subr.bf16.mxu0 0
            %766 = vmatpush1.bf16.msra.mxu0 0
            %767 = vmatprep.subr.bf16.mxu0 0
            %768 = vmatpush1.bf16.msra.mxu0 0
            %769 = vmatprep.subr.bf16.mxu0 0
            %770 = vmatpush1.bf16.msra.mxu0 0
            %771 = vmatprep.subr.bf16.mxu0 0
            %772 = vmatpush1.bf16.msra.mxu0 0
            %773 = vmatprep.subr.bf16.mxu0 0
            %774 = vmatpush1.bf16.msra.mxu0 0
            %775 = vmatprep.mubr.bf16.mxu0 0
            %776 = vmatmul.mubr.bf16.gmra.mrb[0].mxu0 %v742
            %v777 = vpop.f32.mrb[0].mxu0
            %v778 = vadd.f32 %v436, %v777
            %v779 = vpop.f32.mrb[0].mxu0
            %v780 = vpop.f32.mrb[0].mxu0
            %v781 = vpop.f32.mrb[0].mxu0
            %782 = vdwg.mxu0
            %v783 = vmax.f32 %v778, 0.0
            %v784 = vsub.f32 %v783, %v741
            %v785 = vand.u32 2147483647, %v784
            %786 = vmax.xlane.f32.xlu0 %v785
            %v787 = vpop.xlane.xlu0 %786
            %v788 = vrot.slane %v787, 4
            %v789 = vmax.f32 %v787, %v788
            %v790 = vrot.slane %v789, 2
            %v791 = vmax.f32 %v789, %v790
            %v792 = vrot.slane %v791, 1
            %v793 = vmax.f32 %v791, %v792
            %s794 = vtos %v793
            %s795 = sadd.s32 %s439, 8
          $region60: #{tpu_custom_call.1} parent=52 // loop_footer
            _
          $region61: #{tpu_custom_call.1} parent=52 // loop_footer_branch
            %438 = sbr.rel target = $region57
          $region62: #{tpu_custom_call.1} parent=52 // loop_exit
            _
          // While loop
          $region63: #{tpu_custom_call.1} parent=52 // loop_pre_header
            _
          $region64: #{tpu_custom_call.1} parent=52 // loop_header
            %s797 = sphi %s439, %s1385
            %s798 = sphi inf, %s1384
            %v799 = vphi %v441, %v1373
            %p800 = scmp.lt.s32.totalorder %s797, 300
            %p801 = scmp.ge.f32.partialorder %s798, 3e-06
            %p802 = pnand %p800, %p801
            %p803 = pneg %p802
          $region65: #{tpu_custom_call.1} parent=52 // loop_header_branch
            %805 = sbr.rel (%p802) target = $region69
          $region66: #{tpu_custom_call.1} parent=52 // loop_body
            %806 = vmatprep.subr.mxu0 0.0
            %807 = vmatpush1.msra.mxu0 %v298
            %808 = vmatprep.subr.mxu0 0.0
            %809 = vmatpush1.msra.mxu0 %v299
            %810 = vmatprep.subr.mxu0 0.0
            %811 = vmatpush1.msra.mxu0 %v300
            %812 = vmatprep.subr.mxu0 0.0
            %813 = vmatpush1.msra.mxu0 %v301
            %814 = vmatprep.subr.mxu0 0.0
            %815 = vmatpush1.msra.mxu0 %v302
            %816 = vmatprep.subr.mxu0 0.0
            %817 = vmatpush1.msra.mxu0 %v303
            %818 = vmatprep.subr.mxu0 0.0
            %819 = vmatpush1.msra.mxu0 %v304
            %820 = vmatprep.subr.mxu0 0.0
            %821 = vmatpush1.msra.mxu0 %v305
            %822 = vmatprep.subr.mxu0 0.0
            %823 = vmatpush1.msra.mxu0 %v306
            %824 = vmatprep.subr.mxu0 0.0
            %825 = vmatpush1.msra.mxu0 %v307
            %826 = vmatprep.subr.mxu0 0.0
            %827 = vmatpush1.msra.mxu0 %v308
            %828 = vmatprep.subr.mxu0 0.0
            %829 = vmatpush1.msra.mxu0 %v309
            %830 = vmatprep.subr.mxu0 0.0
            %831 = vmatpush1.msra.mxu0 %v310
            %832 = vmatprep.subr.mxu0 0.0
            %833 = vmatpush1.msra.mxu0 %v311
            %834 = vmatprep.subr.mxu0 0.0
            %835 = vmatpush1.msra.mxu0 %v312
            %836 = vmatprep.subr.mxu0 0.0
            %837 = vmatpush1.msra.mxu0 %v313
            %838 = vmatprep.subr.mxu0 0.0
            %839 = vmatpush1.msra.mxu0 0.0
            %840 = vmatprep.subr.mxu0 0.0
            %841 = vmatpush1.msra.mxu0 0.0
            %842 = vmatprep.subr.mxu0 0.0
            %843 = vmatpush1.msra.mxu0 0.0
            %844 = vmatprep.subr.mxu0 0.0
            %845 = vmatpush1.msra.mxu0 0.0
            %846 = vmatprep.subr.mxu0 0.0
            %847 = vmatpush1.msra.mxu0 0.0
            %848 = vmatprep.subr.mxu0 0.0
            %849 = vmatpush1.msra.mxu0 0.0
            %850 = vmatprep.subr.mxu0 0.0
            %851 = vmatpush1.msra.mxu0 0.0
            %852 = vmatprep.subr.mxu0 0.0
            %853 = vmatpush1.msra.mxu0 0.0
            %854 = vmatprep.subr.mxu0 0.0
            %855 = vmatpush1.msra.mxu0 0.0
            %856 = vmatprep.subr.mxu0 0.0
            %857 = vmatpush1.msra.mxu0 0.0
            %858 = vmatprep.subr.mxu0 0.0
            %859 = vmatpush1.msra.mxu0 0.0
            %860 = vmatprep.subr.mxu0 0.0
            %861 = vmatpush1.msra.mxu0 0.0
            %862 = vmatprep.subr.mxu0 0.0
            %863 = vmatpush1.msra.mxu0 0.0
            %864 = vmatprep.subr.mxu0 0.0
            %865 = vmatpush1.msra.mxu0 0.0
            %866 = vmatprep.subr.mxu0 0.0
            %867 = vmatpush1.msra.mxu0 0.0
            %868 = vmatprep.subr.mxu0 0.0
            %869 = vmatpush1.msra.mxu0 0.0
            %870 = vmatprep.mubr.f32.mxu0 0.0
            %871 = vmatmul.mubr.f32.gmra.mrb[0].mxu0 %v799
            %v872 = vpop.f32.mrb[0].mxu0
            %v873 = vadd.f32 %v436, %v872
            %v874 = vpop.f32.mrb[0].mxu0
            %875 = vdwg.mxu0
            %v876 = vmax.f32 %v873, 0.0
            %877 = vmatprep.subr.mxu0 0.0
            %878 = vmatpush1.msra.mxu0 %v298
            %879 = vmatprep.subr.mxu0 0.0
            %880 = vmatpush1.msra.mxu0 %v299
            %881 = vmatprep.subr.mxu0 0.0
            %882 = vmatpush1.msra.mxu0 %v300
            %883 = vmatprep.subr.mxu0 0.0
            %884 = vmatpush1.msra.mxu0 %v301
            %885 = vmatprep.subr.mxu0 0.0
            %886 = vmatpush1.msra.mxu0 %v302
            %887 = vmatprep.subr.mxu0 0.0
            %888 = vmatpush1.msra.mxu0 %v303
            %889 = vmatprep.subr.mxu0 0.0
            %890 = vmatpush1.msra.mxu0 %v304
            %891 = vmatprep.subr.mxu0 0.0
            %892 = vmatpush1.msra.mxu0 %v305
            %893 = vmatprep.subr.mxu0 0.0
            %894 = vmatpush1.msra.mxu0 %v306
            %895 = vmatprep.subr.mxu0 0.0
            %896 = vmatpush1.msra.mxu0 %v307
            %897 = vmatprep.subr.mxu0 0.0
            %898 = vmatpush1.msra.mxu0 %v308
            %899 = vmatprep.subr.mxu0 0.0
            %900 = vmatpush1.msra.mxu0 %v309
            %901 = vmatprep.subr.mxu0 0.0
            %902 = vmatpush1.msra.mxu0 %v310
            %903 = vmatprep.subr.mxu0 0.0
            %904 = vmatpush1.msra.mxu0 %v311
            %905 = vmatprep.subr.mxu0 0.0
            %906 = vmatpush1.msra.mxu0 %v312
            %907 = vmatprep.subr.mxu0 0.0
            %908 = vmatpush1.msra.mxu0 %v313
            %909 = vmatprep.subr.mxu0 0.0
            %910 = vmatpush1.msra.mxu0 0.0
            %911 = vmatprep.subr.mxu0 0.0
            %912 = vmatpush1.msra.mxu0 0.0
            %913 = vmatprep.subr.mxu0 0.0
            %914 = vmatpush1.msra.mxu0 0.0
            %915 = vmatprep.subr.mxu0 0.0
            %916 = vmatpush1.msra.mxu0 0.0
            %917 = vmatprep.subr.mxu0 0.0
            %918 = vmatpush1.msra.mxu0 0.0
            %919 = vmatprep.subr.mxu0 0.0
            %920 = vmatpush1.msra.mxu0 0.0
            %921 = vmatprep.subr.mxu0 0.0
            %922 = vmatpush1.msra.mxu0 0.0
            %923 = vmatprep.subr.mxu0 0.0
            %924 = vmatpush1.msra.mxu0 0.0
            %925 = vmatprep.subr.mxu0 0.0
            %926 = vmatpush1.msra.mxu0 0.0
            %927 = vmatprep.subr.mxu0 0.0
            %928 = vmatpush1.msra.mxu0 0.0
            %929 = vmatprep.subr.mxu0 0.0
            %930 = vmatpush1.msra.mxu0 0.0
            %931 = vmatprep.subr.mxu0 0.0
            %932 = vmatpush1.msra.mxu0 0.0
            %933 = vmatprep.subr.mxu0 0.0
            %934 = vmatpush1.msra.mxu0 0.0
            %935 = vmatprep.subr.mxu0 0.0
            %936 = vmatpush1.msra.mxu0 0.0
            %937 = vmatprep.subr.mxu0 0.0
            %938 = vmatpush1.msra.mxu0 0.0
            %939 = vmatprep.subr.mxu0 0.0
            %940 = vmatpush1.msra.mxu0 0.0
            %941 = vmatprep.mubr.f32.mxu0 0.0
            %942 = vmatmul.mubr.f32.gmra.mrb[0].mxu0 %v876
            %v943 = vpop.f32.mrb[0].mxu0
            %v944 = vadd.f32 %v436, %v943
            %v945 = vpop.f32.mrb[0].mxu0
            %946 = vdwg.mxu0
            %v947 = vmax.f32 %v944, 0.0
            %948 = vmatprep.subr.mxu0 0.0
            %949 = vmatpush1.msra.mxu0 %v298
            %950 = vmatprep.subr.mxu0 0.0
            %951 = vmatpush1.msra.mxu0 %v299
            %952 = vmatprep.subr.mxu0 0.0
            %953 = vmatpush1.msra.mxu0 %v300
            %954 = vmatprep.subr.mxu0 0.0
            %955 = vmatpush1.msra.mxu0 %v301
            %956 = vmatprep.subr.mxu0 0.0
            %957 = vmatpush1.msra.mxu0 %v302
            %958 = vmatprep.subr.mxu0 0.0
            %959 = vmatpush1.msra.mxu0 %v303
            %960 = vmatprep.subr.mxu0 0.0
            %961 = vmatpush1.msra.mxu0 %v304
            %962 = vmatprep.subr.mxu0 0.0
            %963 = vmatpush1.msra.mxu0 %v305
            %964 = vmatprep.subr.mxu0 0.0
            %965 = vmatpush1.msra.mxu0 %v306
            %966 = vmatprep.subr.mxu0 0.0
            %967 = vmatpush1.msra.mxu0 %v307
            %968 = vmatprep.subr.mxu0 0.0
            %969 = vmatpush1.msra.mxu0 %v308
            %970 = vmatprep.subr.mxu0 0.0
            %971 = vmatpush1.msra.mxu0 %v309
            %972 = vmatprep.subr.mxu0 0.0
            %973 = vmatpush1.msra.mxu0 %v310
            %974 = vmatprep.subr.mxu0 0.0
            %975 = vmatpush1.msra.mxu0 %v311
            %976 = vmatprep.subr.mxu0 0.0
            %977 = vmatpush1.msra.mxu0 %v312
            %978 = vmatprep.subr.mxu0 0.0
            %979 = vmatpush1.msra.mxu0 %v313
            %980 = vmatprep.subr.mxu0 0.0
            %981 = vmatpush1.msra.mxu0 0.0
            %982 = vmatprep.subr.mxu0 0.0
            %983 = vmatpush1.msra.mxu0 0.0
            %984 = vmatprep.subr.mxu0 0.0
            %985 = vmatpush1.msra.mxu0 0.0
            %986 = vmatprep.subr.mxu0 0.0
            %987 = vmatpush1.msra.mxu0 0.0
            %988 = vmatprep.subr.mxu0 0.0
            %989 = vmatpush1.msra.mxu0 0.0
            %990 = vmatprep.subr.mxu0 0.0
            %991 = vmatpush1.msra.mxu0 0.0
            %992 = vmatprep.subr.mxu0 0.0
            %993 = vmatpush1.msra.mxu0 0.0
            %994 = vmatprep.subr.mxu0 0.0
            %995 = vmatpush1.msra.mxu0 0.0
            %996 = vmatprep.subr.mxu0 0.0
            %997 = vmatpush1.msra.mxu0 0.0
            %998 = vmatprep.subr.mxu0 0.0
            %999 = vmatpush1.msra.mxu0 0.0
            %1000 = vmatprep.subr.mxu0 0.0
            %1001 = vmatpush1.msra.mxu0 0.0
            %1002 = vmatprep.subr.mxu0 0.0
            %1003 = vmatpush1.msra.mxu0 0.0
            %1004 = vmatprep.subr.mxu0 0.0
            %1005 = vmatpush1.msra.mxu0 0.0
            %1006 = vmatprep.subr.mxu0 0.0
            %1007 = vmatpush1.msra.mxu0 0.0
            %1008 = vmatprep.subr.mxu0 0.0
            %1009 = vmatpush1.msra.mxu0 0.0
            %1010 = vmatprep.subr.mxu0 0.0
            %1011 = vmatpush1.msra.mxu0 0.0
            %1012 = vmatprep.mubr.f32.mxu0 0.0
            %1013 = vmatmul.mubr.f32.gmra.mrb[0].mxu0 %v947
            %v1014 = vpop.f32.mrb[0].mxu0
            %v1015 = vadd.f32 %v436, %v1014
            %v1016 = vpop.f32.mrb[0].mxu0
            %1017 = vdwg.mxu0
            %v1018 = vmax.f32 %v1015, 0.0
            %1019 = vmatprep.subr.mxu0 0.0
            %1020 = vmatpush1.msra.mxu0 %v298
            %1021 = vmatprep.subr.mxu0 0.0
            %1022 = vmatpush1.msra.mxu0 %v299
            %1023 = vmatprep.subr.mxu0 0.0
            %1024 = vmatpush1.msra.mxu0 %v300
            %1025 = vmatprep.subr.mxu0 0.0
            %1026 = vmatpush1.msra.mxu0 %v301
            %1027 = vmatprep.subr.mxu0 0.0
            %1028 = vmatpush1.msra.mxu0 %v302
            %1029 = vmatprep.subr.mxu0 0.0
            %1030 = vmatpush1.msra.mxu0 %v303
            %1031 = vmatprep.subr.mxu0 0.0
            %1032 = vmatpush1.msra.mxu0 %v304
            %1033 = vmatprep.subr.mxu0 0.0
            %1034 = vmatpush1.msra.mxu0 %v305
            %1035 = vmatprep.subr.mxu0 0.0
            %1036 = vmatpush1.msra.mxu0 %v306
            %1037 = vmatprep.subr.mxu0 0.0
            %1038 = vmatpush1.msra.mxu0 %v307
            %1039 = vmatprep.subr.mxu0 0.0
            %1040 = vmatpush1.msra.mxu0 %v308
            %1041 = vmatprep.subr.mxu0 0.0
            %1042 = vmatpush1.msra.mxu0 %v309
            %1043 = vmatprep.subr.mxu0 0.0
            %1044 = vmatpush1.msra.mxu0 %v310
            %1045 = vmatprep.subr.mxu0 0.0
            %1046 = vmatpush1.msra.mxu0 %v311
            %1047 = vmatprep.subr.mxu0 0.0
            %1048 = vmatpush1.msra.mxu0 %v312
            %1049 = vmatprep.subr.mxu0 0.0
            %1050 = vmatpush1.msra.mxu0 %v313
            %1051 = vmatprep.subr.mxu0 0.0
            %1052 = vmatpush1.msra.mxu0 0.0
            %1053 = vmatprep.subr.mxu0 0.0
            %1054 = vmatpush1.msra.mxu0 0.0
            %1055 = vmatprep.subr.mxu0 0.0
            %1056 = vmatpush1.msra.mxu0 0.0
            %1057 = vmatprep.subr.mxu0 0.0
            %1058 = vmatpush1.msra.mxu0 0.0
            %1059 = vmatprep.subr.mxu0 0.0
            %1060 = vmatpush1.msra.mxu0 0.0
            %1061 = vmatprep.subr.mxu0 0.0
            %1062 = vmatpush1.msra.mxu0 0.0
            %1063 = vmatprep.subr.mxu0 0.0
            %1064 = vmatpush1.msra.mxu0 0.0
            %1065 = vmatprep.subr.mxu0 0.0
            %1066 = vmatpush1.msra.mxu0 0.0
            %1067 = vmatprep.subr.mxu0 0.0
            %1068 = vmatpush1.msra.mxu0 0.0
            %1069 = vmatprep.subr.mxu0 0.0
            %1070 = vmatpush1.msra.mxu0 0.0
            %1071 = vmatprep.subr.mxu0 0.0
            %1072 = vmatpush1.msra.mxu0 0.0
            %1073 = vmatprep.subr.mxu0 0.0
            %1074 = vmatpush1.msra.mxu0 0.0
            %1075 = vmatprep.subr.mxu0 0.0
            %1076 = vmatpush1.msra.mxu0 0.0
            %1077 = vmatprep.subr.mxu0 0.0
            %1078 = vmatpush1.msra.mxu0 0.0
            %1079 = vmatprep.subr.mxu0 0.0
            %1080 = vmatpush1.msra.mxu0 0.0
            %1081 = vmatprep.subr.mxu0 0.0
            %1082 = vmatpush1.msra.mxu0 0.0
            %1083 = vmatprep.mubr.f32.mxu0 0.0
            %1084 = vmatmul.mubr.f32.gmra.mrb[0].mxu0 %v1018
            %v1085 = vpop.f32.mrb[0].mxu0
            %v1086 = vadd.f32 %v436, %v1085
            %v1087 = vpop.f32.mrb[0].mxu0
            %1088 = vdwg.mxu0
            %v1089 = vmax.f32 %v1086, 0.0
            %1090 = vmatprep.subr.mxu0 0.0
            %1091 = vmatpush1.msra.mxu0 %v298
            %1092 = vmatprep.subr.mxu0 0.0
            %1093 = vmatpush1.msra.mxu0 %v299
            %1094 = vmatprep.subr.mxu0 0.0
            %1095 = vmatpush1.msra.mxu0 %v300
            %1096 = vmatprep.subr.mxu0 0.0
            %1097 = vmatpush1.msra.mxu0 %v301
            %1098 = vmatprep.subr.mxu0 0.0
            %1099 = vmatpush1.msra.mxu0 %v302
            %1100 = vmatprep.subr.mxu0 0.0
            %1101 = vmatpush1.msra.mxu0 %v303
            %1102 = vmatprep.subr.mxu0 0.0
            %1103 = vmatpush1.msra.mxu0 %v304
            %1104 = vmatprep.subr.mxu0 0.0
            %1105 = vmatpush1.msra.mxu0 %v305
            %1106 = vmatprep.subr.mxu0 0.0
            %1107 = vmatpush1.msra.mxu0 %v306
            %1108 = vmatprep.subr.mxu0 0.0
            %1109 = vmatpush1.msra.mxu0 %v307
            %1110 = vmatprep.subr.mxu0 0.0
            %1111 = vmatpush1.msra.mxu0 %v308
            %1112 = vmatprep.subr.mxu0 0.0
            %1113 = vmatpush1.msra.mxu0 %v309
            %1114 = vmatprep.subr.mxu0 0.0
            %1115 = vmatpush1.msra.mxu0 %v310
            %1116 = vmatprep.subr.mxu0 0.0
            %1117 = vmatpush1.msra.mxu0 %v311
            %1118 = vmatprep.subr.mxu0 0.0
            %1119 = vmatpush1.msra.mxu0 %v312
            %1120 = vmatprep.subr.mxu0 0.0
            %1121 = vmatpush1.msra.mxu0 %v313
            %1122 = vmatprep.subr.mxu0 0.0
            %1123 = vmatpush1.msra.mxu0 0.0
            %1124 = vmatprep.subr.mxu0 0.0
            %1125 = vmatpush1.msra.mxu0 0.0
            %1126 = vmatprep.subr.mxu0 0.0
            %1127 = vmatpush1.msra.mxu0 0.0
            %1128 = vmatprep.subr.mxu0 0.0
            %1129 = vmatpush1.msra.mxu0 0.0
            %1130 = vmatprep.subr.mxu0 0.0
            %1131 = vmatpush1.msra.mxu0 0.0
            %1132 = vmatprep.subr.mxu0 0.0
            %1133 = vmatpush1.msra.mxu0 0.0
            %1134 = vmatprep.subr.mxu0 0.0
            %1135 = vmatpush1.msra.mxu0 0.0
            %1136 = vmatprep.subr.mxu0 0.0
            %1137 = vmatpush1.msra.mxu0 0.0
            %1138 = vmatprep.subr.mxu0 0.0
            %1139 = vmatpush1.msra.mxu0 0.0
            %1140 = vmatprep.subr.mxu0 0.0
            %1141 = vmatpush1.msra.mxu0 0.0
            %1142 = vmatprep.subr.mxu0 0.0
            %1143 = vmatpush1.msra.mxu0 0.0
            %1144 = vmatprep.subr.mxu0 0.0
            %1145 = vmatpush1.msra.mxu0 0.0
            %1146 = vmatprep.subr.mxu0 0.0
            %1147 = vmatpush1.msra.mxu0 0.0
            %1148 = vmatprep.subr.mxu0 0.0
            %1149 = vmatpush1.msra.mxu0 0.0
            %1150 = vmatprep.subr.mxu0 0.0
            %1151 = vmatpush1.msra.mxu0 0.0
            %1152 = vmatprep.subr.mxu0 0.0
            %1153 = vmatpush1.msra.mxu0 0.0
            %1154 = vmatprep.mubr.f32.mxu0 0.0
            %1155 = vmatmul.mubr.f32.gmra.mrb[0].mxu0 %v1089
            %v1156 = vpop.f32.mrb[0].mxu0
            %v1157 = vadd.f32 %v436, %v1156
            %v1158 = vpop.f32.mrb[0].mxu0
            %1159 = vdwg.mxu0
            %v1160 = vmax.f32 %v1157, 0.0
            %1161 = vmatprep.subr.mxu0 0.0
            %1162 = vmatpush1.msra.mxu0 %v298
            %1163 = vmatprep.subr.mxu0 0.0
            %1164 = vmatpush1.msra.mxu0 %v299
            %1165 = vmatprep.subr.mxu0 0.0
            %1166 = vmatpush1.msra.mxu0 %v300
            %1167 = vmatprep.subr.mxu0 0.0
            %1168 = vmatpush1.msra.mxu0 %v301
            %1169 = vmatprep.subr.mxu0 0.0
            %1170 = vmatpush1.msra.mxu0 %v302
            %1171 = vmatprep.subr.mxu0 0.0
            %1172 = vmatpush1.msra.mxu0 %v303
            %1173 = vmatprep.subr.mxu0 0.0
            %1174 = vmatpush1.msra.mxu0 %v304
            %1175 = vmatprep.subr.mxu0 0.0
            %1176 = vmatpush1.msra.mxu0 %v305
            %1177 = vmatprep.subr.mxu0 0.0
            %1178 = vmatpush1.msra.mxu0 %v306
            %1179 = vmatprep.subr.mxu0 0.0
            %1180 = vmatpush1.msra.mxu0 %v307
            %1181 = vmatprep.subr.mxu0 0.0
            %1182 = vmatpush1.msra.mxu0 %v308
            %1183 = vmatprep.subr.mxu0 0.0
            %1184 = vmatpush1.msra.mxu0 %v309
            %1185 = vmatprep.subr.mxu0 0.0
            %1186 = vmatpush1.msra.mxu0 %v310
            %1187 = vmatprep.subr.mxu0 0.0
            %1188 = vmatpush1.msra.mxu0 %v311
            %1189 = vmatprep.subr.mxu0 0.0
            %1190 = vmatpush1.msra.mxu0 %v312
            %1191 = vmatprep.subr.mxu0 0.0
            %1192 = vmatpush1.msra.mxu0 %v313
            %1193 = vmatprep.subr.mxu0 0.0
            %1194 = vmatpush1.msra.mxu0 0.0
            %1195 = vmatprep.subr.mxu0 0.0
            %1196 = vmatpush1.msra.mxu0 0.0
            %1197 = vmatprep.subr.mxu0 0.0
            %1198 = vmatpush1.msra.mxu0 0.0
            %1199 = vmatprep.subr.mxu0 0.0
            %1200 = vmatpush1.msra.mxu0 0.0
            %1201 = vmatprep.subr.mxu0 0.0
            %1202 = vmatpush1.msra.mxu0 0.0
            %1203 = vmatprep.subr.mxu0 0.0
            %1204 = vmatpush1.msra.mxu0 0.0
            %1205 = vmatprep.subr.mxu0 0.0
            %1206 = vmatpush1.msra.mxu0 0.0
            %1207 = vmatprep.subr.mxu0 0.0
            %1208 = vmatpush1.msra.mxu0 0.0
            %1209 = vmatprep.subr.mxu0 0.0
            %1210 = vmatpush1.msra.mxu0 0.0
            %1211 = vmatprep.subr.mxu0 0.0
            %1212 = vmatpush1.msra.mxu0 0.0
            %1213 = vmatprep.subr.mxu0 0.0
            %1214 = vmatpush1.msra.mxu0 0.0
            %1215 = vmatprep.subr.mxu0 0.0
            %1216 = vmatpush1.msra.mxu0 0.0
            %1217 = vmatprep.subr.mxu0 0.0
            %1218 = vmatpush1.msra.mxu0 0.0
            %1219 = vmatprep.subr.mxu0 0.0
            %1220 = vmatpush1.msra.mxu0 0.0
            %1221 = vmatprep.subr.mxu0 0.0
            %1222 = vmatpush1.msra.mxu0 0.0
            %1223 = vmatprep.subr.mxu0 0.0
            %1224 = vmatpush1.msra.mxu0 0.0
            %1225 = vmatprep.mubr.f32.mxu0 0.0
            %1226 = vmatmul.mubr.f32.gmra.mrb[0].mxu0 %v1160
            %v1227 = vpop.f32.mrb[0].mxu0
            %v1228 = vadd.f32 %v436, %v1227
            %v1229 = vpop.f32.mrb[0].mxu0
            %1230 = vdwg.mxu0
            %v1231 = vmax.f32 %v1228, 0.0
            %1232 = vmatprep.subr.mxu0 0.0
            %1233 = vmatpush1.msra.mxu0 %v298
            %1234 = vmatprep.subr.mxu0 0.0
            %1235 = vmatpush1.msra.mxu0 %v299
            %1236 = vmatprep.subr.mxu0 0.0
            %1237 = vmatpush1.msra.mxu0 %v300
            %1238 = vmatprep.subr.mxu0 0.0
            %1239 = vmatpush1.msra.mxu0 %v301
            %1240 = vmatprep.subr.mxu0 0.0
            %1241 = vmatpush1.msra.mxu0 %v302
            %1242 = vmatprep.subr.mxu0 0.0
            %1243 = vmatpush1.msra.mxu0 %v303
            %1244 = vmatprep.subr.mxu0 0.0
            %1245 = vmatpush1.msra.mxu0 %v304
            %1246 = vmatprep.subr.mxu0 0.0
            %1247 = vmatpush1.msra.mxu0 %v305
            %1248 = vmatprep.subr.mxu0 0.0
            %1249 = vmatpush1.msra.mxu0 %v306
            %1250 = vmatprep.subr.mxu0 0.0
            %1251 = vmatpush1.msra.mxu0 %v307
            %1252 = vmatprep.subr.mxu0 0.0
            %1253 = vmatpush1.msra.mxu0 %v308
            %1254 = vmatprep.subr.mxu0 0.0
            %1255 = vmatpush1.msra.mxu0 %v309
            %1256 = vmatprep.subr.mxu0 0.0
            %1257 = vmatpush1.msra.mxu0 %v310
            %1258 = vmatprep.subr.mxu0 0.0
            %1259 = vmatpush1.msra.mxu0 %v311
            %1260 = vmatprep.subr.mxu0 0.0
            %1261 = vmatpush1.msra.mxu0 %v312
            %1262 = vmatprep.subr.mxu0 0.0
            %1263 = vmatpush1.msra.mxu0 %v313
            %1264 = vmatprep.subr.mxu0 0.0
            %1265 = vmatpush1.msra.mxu0 0.0
            %1266 = vmatprep.subr.mxu0 0.0
            %1267 = vmatpush1.msra.mxu0 0.0
            %1268 = vmatprep.subr.mxu0 0.0
            %1269 = vmatpush1.msra.mxu0 0.0
            %1270 = vmatprep.subr.mxu0 0.0
            %1271 = vmatpush1.msra.mxu0 0.0
            %1272 = vmatprep.subr.mxu0 0.0
            %1273 = vmatpush1.msra.mxu0 0.0
            %1274 = vmatprep.subr.mxu0 0.0
            %1275 = vmatpush1.msra.mxu0 0.0
            %1276 = vmatprep.subr.mxu0 0.0
            %1277 = vmatpush1.msra.mxu0 0.0
            %1278 = vmatprep.subr.mxu0 0.0
            %1279 = vmatpush1.msra.mxu0 0.0
            %1280 = vmatprep.subr.mxu0 0.0
            %1281 = vmatpush1.msra.mxu0 0.0
            %1282 = vmatprep.subr.mxu0 0.0
            %1283 = vmatpush1.msra.mxu0 0.0
            %1284 = vmatprep.subr.mxu0 0.0
            %1285 = vmatpush1.msra.mxu0 0.0
            %1286 = vmatprep.subr.mxu0 0.0
            %1287 = vmatpush1.msra.mxu0 0.0
            %1288 = vmatprep.subr.mxu0 0.0
            %1289 = vmatpush1.msra.mxu0 0.0
            %1290 = vmatprep.subr.mxu0 0.0
            %1291 = vmatpush1.msra.mxu0 0.0
            %1292 = vmatprep.subr.mxu0 0.0
            %1293 = vmatpush1.msra.mxu0 0.0
            %1294 = vmatprep.subr.mxu0 0.0
            %1295 = vmatpush1.msra.mxu0 0.0
            %1296 = vmatprep.mubr.f32.mxu0 0.0
            %1297 = vmatmul.mubr.f32.gmra.mrb[0].mxu0 %v1231
            %v1298 = vpop.f32.mrb[0].mxu0
            %v1299 = vadd.f32 %v436, %v1298
            %v1300 = vpop.f32.mrb[0].mxu0
            %1301 = vdwg.mxu0
            %v1302 = vmax.f32 %v1299, 0.0
            %1303 = vmatprep.subr.mxu0 0.0
            %1304 = vmatpush1.msra.mxu0 %v298
            %1305 = vmatprep.subr.mxu0 0.0
            %1306 = vmatpush1.msra.mxu0 %v299
            %1307 = vmatprep.subr.mxu0 0.0
            %1308 = vmatpush1.msra.mxu0 %v300
            %1309 = vmatprep.subr.mxu0 0.0
            %1310 = vmatpush1.msra.mxu0 %v301
            %1311 = vmatprep.subr.mxu0 0.0
            %1312 = vmatpush1.msra.mxu0 %v302
            %1313 = vmatprep.subr.mxu0 0.0
            %1314 = vmatpush1.msra.mxu0 %v303
            %1315 = vmatprep.subr.mxu0 0.0
            %1316 = vmatpush1.msra.mxu0 %v304
            %1317 = vmatprep.subr.mxu0 0.0
            %1318 = vmatpush1.msra.mxu0 %v305
            %1319 = vmatprep.subr.mxu0 0.0
            %1320 = vmatpush1.msra.mxu0 %v306
            %1321 = vmatprep.subr.mxu0 0.0
            %1322 = vmatpush1.msra.mxu0 %v307
            %1323 = vmatprep.subr.mxu0 0.0
            %1324 = vmatpush1.msra.mxu0 %v308
            %1325 = vmatprep.subr.mxu0 0.0
            %1326 = vmatpush1.msra.mxu0 %v309
            %1327 = vmatprep.subr.mxu0 0.0
            %1328 = vmatpush1.msra.mxu0 %v310
            %1329 = vmatprep.subr.mxu0 0.0
            %1330 = vmatpush1.msra.mxu0 %v311
            %1331 = vmatprep.subr.mxu0 0.0
            %1332 = vmatpush1.msra.mxu0 %v312
            %1333 = vmatprep.subr.mxu0 0.0
            %1334 = vmatpush1.msra.mxu0 %v313
            %1335 = vmatprep.subr.mxu0 0.0
            %1336 = vmatpush1.msra.mxu0 0.0
            %1337 = vmatprep.subr.mxu0 0.0
            %1338 = vmatpush1.msra.mxu0 0.0
            %1339 = vmatprep.subr.mxu0 0.0
            %1340 = vmatpush1.msra.mxu0 0.0
            %1341 = vmatprep.subr.mxu0 0.0
            %1342 = vmatpush1.msra.mxu0 0.0
            %1343 = vmatprep.subr.mxu0 0.0
            %1344 = vmatpush1.msra.mxu0 0.0
            %1345 = vmatprep.subr.mxu0 0.0
            %1346 = vmatpush1.msra.mxu0 0.0
            %1347 = vmatprep.subr.mxu0 0.0
            %1348 = vmatpush1.msra.mxu0 0.0
            %1349 = vmatprep.subr.mxu0 0.0
            %1350 = vmatpush1.msra.mxu0 0.0
            %1351 = vmatprep.subr.mxu0 0.0
            %1352 = vmatpush1.msra.mxu0 0.0
            %1353 = vmatprep.subr.mxu0 0.0
            %1354 = vmatpush1.msra.mxu0 0.0
            %1355 = vmatprep.subr.mxu0 0.0
            %1356 = vmatpush1.msra.mxu0 0.0
            %1357 = vmatprep.subr.mxu0 0.0
            %1358 = vmatpush1.msra.mxu0 0.0
            %1359 = vmatprep.subr.mxu0 0.0
            %1360 = vmatpush1.msra.mxu0 0.0
            %1361 = vmatprep.subr.mxu0 0.0
            %1362 = vmatpush1.msra.mxu0 0.0
            %1363 = vmatprep.subr.mxu0 0.0
            %1364 = vmatpush1.msra.mxu0 0.0
            %1365 = vmatprep.subr.mxu0 0.0
            %1366 = vmatpush1.msra.mxu0 0.0
            %1367 = vmatprep.mubr.f32.mxu0 0.0
            %1368 = vmatmul.mubr.f32.gmra.mrb[0].mxu0 %v1302
            %v1369 = vpop.f32.mrb[0].mxu0
            %v1370 = vadd.f32 %v436, %v1369
            %v1371 = vpop.f32.mrb[0].mxu0
            %1372 = vdwg.mxu0
            %v1373 = vmax.f32 %v1370, 0.0
            %v1374 = vsub.f32 %v1373, %v1302
            %v1375 = vand.u32 2147483647, %v1374
            %1376 = vmax.xlane.f32.xlu0 %v1375
            %v1377 = vpop.xlane.xlu0 %1376
            %v1378 = vrot.slane %v1377, 4
            %v1379 = vmax.f32 %v1377, %v1378
            %v1380 = vrot.slane %v1379, 2
            %v1381 = vmax.f32 %v1379, %v1380
            %v1382 = vrot.slane %v1381, 1
            %v1383 = vmax.f32 %v1381, %v1382
            %s1384 = vtos %v1383
            %s1385 = sadd.s32 %s797, 8
          $region67: #{tpu_custom_call.1} parent=52 // loop_footer
            _
          $region68: #{tpu_custom_call.1} parent=52 // loop_footer_branch
            %796 = sbr.rel target = $region64
          $region69: #{tpu_custom_call.1} parent=52 // loop_exit
            _
          %1386 = vmatprep.subr.mxu0 0.0
          %1387 = vmatpush1.msra.mxu0 %v330
          %1388 = vmatprep.subr.mxu0 0.0
          %1389 = vmatpush1.msra.mxu0 %v331
          %1390 = vmatprep.subr.mxu0 0.0
          %1391 = vmatpush1.msra.mxu0 %v332
          %1392 = vmatprep.subr.mxu0 0.0
          %1393 = vmatpush1.msra.mxu0 %v333
          %1394 = vmatprep.subr.mxu0 0.0
          %1395 = vmatpush1.msra.mxu0 %v334
          %1396 = vmatprep.subr.mxu0 0.0
          %1397 = vmatpush1.msra.mxu0 %v335
          %1398 = vmatprep.subr.mxu0 0.0
          %1399 = vmatpush1.msra.mxu0 %v336
          %1400 = vmatprep.subr.mxu0 0.0
          %1401 = vmatpush1.msra.mxu0 %v337
          %1402 = vmatprep.subr.mxu0 0.0
          %1403 = vmatpush1.msra.mxu0 %v338
          %1404 = vmatprep.subr.mxu0 0.0
          %1405 = vmatpush1.msra.mxu0 %v339
          %1406 = vmatprep.subr.mxu0 0.0
          %1407 = vmatpush1.msra.mxu0 %v340
          %1408 = vmatprep.subr.mxu0 0.0
          %1409 = vmatpush1.msra.mxu0 %v341
          %1410 = vmatprep.subr.mxu0 0.0
          %1411 = vmatpush1.msra.mxu0 %v342
          %1412 = vmatprep.subr.mxu0 0.0
          %1413 = vmatpush1.msra.mxu0 %v343
          %1414 = vmatprep.subr.mxu0 0.0
          %1415 = vmatpush1.msra.mxu0 %v344
          %1416 = vmatprep.subr.mxu0 0.0
          %1417 = vmatpush1.msra.mxu0 %v345
          %1418 = vmatprep.subr.mxu0 0.0
          %1419 = vmatpush1.msra.mxu0 0.0
          %1420 = vmatprep.subr.mxu0 0.0
          %1421 = vmatpush1.msra.mxu0 0.0
          %1422 = vmatprep.subr.mxu0 0.0
          %1423 = vmatpush1.msra.mxu0 0.0
          %1424 = vmatprep.subr.mxu0 0.0
          %1425 = vmatpush1.msra.mxu0 0.0
          %1426 = vmatprep.subr.mxu0 0.0
          %1427 = vmatpush1.msra.mxu0 0.0
          %1428 = vmatprep.subr.mxu0 0.0
          %1429 = vmatpush1.msra.mxu0 0.0
          %1430 = vmatprep.subr.mxu0 0.0
          %1431 = vmatpush1.msra.mxu0 0.0
          %1432 = vmatprep.subr.mxu0 0.0
          %1433 = vmatpush1.msra.mxu0 0.0
          %1434 = vmatprep.subr.mxu0 0.0
          %1435 = vmatpush1.msra.mxu0 0.0
          %1436 = vmatprep.subr.mxu0 0.0
          %1437 = vmatpush1.msra.mxu0 0.0
          %1438 = vmatprep.subr.mxu0 0.0
          %1439 = vmatpush1.msra.mxu0 0.0
          %1440 = vmatprep.subr.mxu0 0.0
          %1441 = vmatpush1.msra.mxu0 0.0
          %1442 = vmatprep.subr.mxu0 0.0
          %1443 = vmatpush1.msra.mxu0 0.0
          %1444 = vmatprep.subr.mxu0 0.0
          %1445 = vmatpush1.msra.mxu0 0.0
          %1446 = vmatprep.subr.mxu0 0.0
          %1447 = vmatpush1.msra.mxu0 0.0
          %1448 = vmatprep.subr.mxu0 0.0
          %1449 = vmatpush1.msra.mxu0 0.0
          %1450 = vmatprep.mubr.f32.mxu0 0.0
          %1451 = vmatmul.mubr.f32.gmra.mrb[0].mxu0 %v799
          %v1452 = vpop.f32.mrb[0].mxu0
          %v1453 = vadd.f32 %v437, %v1452
          %v1454 = vpop.f32.mrb[0].mxu0
          %1455 = vdwg.mxu0
          %s1456 = smul.u32 %s349, 8
          %s1457 = scalar_lea.vmem %s280, %s1456 [#allocation8]
          %1458 = vst.msk [vmem:[%s1457] sm:$0xff] %vm361, %v1453
        $region53: #{tpu_custom_call.1} parent=35 // loop_footer
          %s353 = sadd.s32 1, %s349
        $region54: #{tpu_custom_call.1} parent=35 // loop_footer_branch
          %348 = sbr.rel target = $region50
        $region55: #{tpu_custom_call.1} parent=35 // loop_exit
          _
        %vm1459 = vcmask 261120
        %1460 = vst.msk [vmem:[%s287] sm:$0xff] %vm1459, %v354
        %1461 = vst [vmem:[#allocation2] sm:$0xff] %v355
        %s1462 = sand.u32 %s140, 1
        %s1463 = scalar_lea.sflag [#allocation5], %s1462
        %s1464 = sand.u32 %s140, 1
        %s1465 = smul.addr %s1464, 64
        %s1466 = scalar_lea.vmem [#allocation8], %s1465
        %s1467 = sand.u32 %s166, 1
        %s1468 = scalar_lea.sflag [#allocation10], %s1467
        %s1469 = sand.u32 %s166, 1
        %s1470 = smul.addr %s1469, 8
        %s1471 = scalar_lea.vmem [#allocation9], %s1470
        // Predicated region
        $region70: #{tpu_custom_call.1} parent=35 // pred_check
          %p1472 = pneg %p150
        $region71: #{tpu_custom_call.1} parent=35 // pred_check_branch
          %1474 = sbr.rel (%p1472) target = $region73
        $region72: #{tpu_custom_call.1} parent=35 // pred_region
          %s1475 = smul.u32 8, %s32
          %s1477 = ssub.s32 1024, 1024
          %1478 = vsyncadd %s1463, %s1477
          %s1479 = smul.addr %s1475, 2
          %s1480 = sadd.s32 %s31, %s1479
          %s1481 = smul.addr %s1480, 128
          %s1482 = scalar_lea.hbm %s4, %s1481
          %s1483 = sshll.u32 %s1466, 4
          %s1484 = int_to_ptr.vmem [resolvable:$true] %s1483
          %1489 = dma.vmem_to_hbm [thread:$0]  %s1484, 1024, %s1482, %s1463, 128, 256, 8
        $region73: #{tpu_custom_call.1} parent=35 // pred_fallthru
          _
        // Predicated region
        $region74: #{tpu_custom_call.1} parent=35 // pred_check
          %p1490 = pneg %p176
        $region75: #{tpu_custom_call.1} parent=35 // pred_check_branch
          %1492 = sbr.rel (%p1490) target = $region77
        $region76: #{tpu_custom_call.1} parent=35 // pred_region
          %s1494 = ssub.s32 128, 128
          %1495 = vsyncadd %s1468, %s1494
          %s1496 = smul.addr %s31, 128
          %s1497 = scalar_lea.hbm %s5, %s1496
          %s1499 = sshll.u32 %s1471, 4
          %s1500 = int_to_ptr.vmem [resolvable:$true] %s1499
          %1502 = dma.vmem_to_hbm [thread:$0]  %s1500, 128, %s1497, %s1468
        $region77: #{tpu_custom_call.1} parent=35 // pred_fallthru
          _
      $region36: #{tpu_custom_call.1} parent=5 // pred_fallthru
        _
      %p1503 = scmp.le.s32.totalorder 2, %s22
      // Predicated region
      $region78: #{tpu_custom_call.1} parent=5 // pred_check
        %p1504 = pneg %p1503
      $region79: #{tpu_custom_call.1} parent=5 // pred_check_branch
        %1506 = sbr.rel (%p1504) target = $region81
      $region80: #{tpu_custom_call.1} parent=5 // pred_region
        %s1507 = ssub.s32 %s22, 2
        // Predicated region
        $region82: #{tpu_custom_call.1} parent=80 // pred_check
          %p1508 = pneg %p156
        $region83: #{tpu_custom_call.1} parent=80 // pred_check_branch
          %1510 = sbr.rel (%p1508) target = $region85
        $region84: #{tpu_custom_call.1} parent=80 // pred_region
          %s1511 = sand.u32 %s141, 1
          %s1512 = scalar_lea.sflag [#allocation5], %s1511
          %s1513 = sand.u32 %s141, 1
          %s1514 = smul.addr %s1513, 64
          %s1515 = scalar_lea.vmem [#allocation8], %s1514
          %1516 = dma.done %s1512, 1024
        $region85: #{tpu_custom_call.1} parent=80 // pred_fallthru
          _
        // Predicated region
        $region86: #{tpu_custom_call.1} parent=80 // pred_check
          %p1517 = pneg %p182
        $region87: #{tpu_custom_call.1} parent=80 // pred_check_branch
          %1519 = sbr.rel (%p1517) target = $region89
        $region88: #{tpu_custom_call.1} parent=80 // pred_region
          %s1520 = sand.u32 %s167, 1
          %s1521 = scalar_lea.sflag [#allocation10], %s1520
          %s1522 = sand.u32 %s167, 1
          %s1523 = smul.addr %s1522, 8
          %s1524 = scalar_lea.vmem [#allocation9], %s1523
          %1525 = dma.done %s1521, 128
        $region89: #{tpu_custom_call.1} parent=80 // pred_fallthru
          _
      $region81: #{tpu_custom_call.1} parent=5 // pred_fallthru
        _
    $region6: #{tpu_custom_call.1} parent=1 // loop_footer
      %s26 = sadd.s32 1, %s22
    $region7: #{tpu_custom_call.1} parent=1 // loop_footer_branch
      %21 = sbr.rel target = $region3
    $region8: #{tpu_custom_call.1} parent=1 // loop_exit
      _
    %1526 = vsyncpa [#allocation4], 1
    %s1527 = scalar_lea.sflag [#allocation4], 1
    %1528 = vsyncpa %s1527, 1
    %1529 = vsyncpa [#allocation7], 1
    %1530 = vsyncpa [#allocation5], 1
    %s1531 = scalar_lea.sflag [#allocation5], 1
    %1532 = vsyncpa %s1531, 1
    %1533 = vsyncpa [#allocation10], 1
    %s1534 = scalar_lea.sflag [#allocation10], 1
    %1535 = vsyncpa %s1534, 1

</llo_original>
